<compile_context>
chip_gen: v5e
topology: v5e:2x2
jax: 0.10.0
libtpu: 0.0.40
codegen_flags: <defaults>
</compile_context>

<pallas_src>
import functools
import math

import jax
import jax.numpy as jnp
from jax.experimental import pallas as pl
from jax.experimental.pallas import tpu as pltpu


def _round_up(a: int, b: int) -> int:
    return (a + b - 1) // b * b


# ---------------------------------------------------------------------------
# Pallas kernel: one tile of TN physical rows per grid step; each physical row
# packs TWO logical elements of x into the two lane halves [0:H) and [H:2H).
# ---------------------------------------------------------------------------
def radial_basis_kernel(
    x_ref,    # [TN, 2]    f32   packed input (col 0 = even elems, col 1 = odd)
    w1_ref,   # [1, 2H]    f32   Linear(1, H) weight, tiled twice
    b1_ref,   # [1, 2H]    f32
    w2_ref,   # [2H, 2H]   bf16  block-diag(g1*w2, g1*w2)
    b2_ref,   # [1, 2H]    f32
    w3_ref,   # [2H, Dp2]  bf16  block-diag(g2*w3, g2*w3), lane-padded
    b3_ref,   # [1, Dp2]   f32
    out_ref,  # [TN, Dp2]  f32
    *,
    hidden: int,
    ln_eps: float,
):
    tn = x_ref.shape[0]
    h2 = w1_ref.shape[1]          # 2 * hidden
    inv_h = 1.0 / hidden

    # Lane-half mask, built once and reused (JAX does not CSE broadcasts).
    lane = jax.lax.broadcasted_iota(jnp.int32, (tn, h2), 1)
    mask_a = lane < hidden

    def seg_layer_norm(y):
        # LayerNorm(hidden, bias=False) applied to each lane half independently.
        # gamma is folded into the following weight matrix (wrapper side).
        # One-pass variance: var = E[y^2] - mu^2, so y*y overlaps the mu reduce.
        y_a = jnp.where(mask_a, y, 0.0)
        y2 = y * y
        y2_a = jnp.where(mask_a, y2, 0.0)
        mu_a = jnp.sum(y_a, axis=-1, keepdims=True) * inv_h
        mu_b = jnp.sum(y, axis=-1, keepdims=True) * inv_h - mu_a
        e2_a = jnp.sum(y2_a, axis=-1, keepdims=True) * inv_h
        e2_b = jnp.sum(y2, axis=-1, keepdims=True) * inv_h - e2_a
        inv_a = jax.lax.rsqrt(jnp.maximum(e2_a - mu_a * mu_a, 0.0) + ln_eps)
        inv_b = jax.lax.rsqrt(jnp.maximum(e2_b - mu_b * mu_b, 0.0) + ln_eps)
        mu = jnp.where(mask_a, mu_a, mu_b)
        inv = jnp.where(mask_a, inv_a, inv_b)
        return (y - mu) * inv

    # --- Linear(1, H): rank-1, VPU broadcast over the packed pair -----------
    x_sel = jnp.where(mask_a, x_ref[:, 0:1], x_ref[:, 1:2])   # [TN, 2H]
    y = x_sel * w1_ref[...] + b1_ref[...]
    y = y * jax.nn.sigmoid(y)                                  # SiLU (EUP)
    y = seg_layer_norm(y)

    # --- Linear(H, H): bf16 MXU operands, f32 accumulation ------------------
    y = jnp.dot(y.astype(jnp.bfloat16), w2_ref[...],
                preferred_element_type=jnp.float32) + b2_ref[...]
    y = y * jax.nn.sigmoid(y)
    y = seg_layer_norm(y)

    # --- Linear(H, dim): lane-dense output store (Dp2 % 128 == 0) -----------
    out = jnp.dot(y.astype(jnp.bfloat16), w3_ref[...],
                  preferred_element_type=jnp.float32) + b3_ref[...]
    out_ref[...] = out.astype(out_ref.dtype)


# ---------------------------------------------------------------------------
# Wrapper
# ---------------------------------------------------------------------------
def _choose_row_tile(rows: int, tile_rows: int, *, min_tile: int = 64,
                     target_steps: int = 8) -> int:
    """Row tile (multiple of 8); shrinks for small inputs so the grid keeps
    several steps (pipelining + even split across v7x's 2 TensorCores)."""
    rows8 = _round_up(max(rows, 1), 8)
    tn = max(min(_round_up(tile_rows, 8), rows8), 8)
    while tn > min_tile and (rows8 + tn - 1) // tn < target_steps:
        tn = max(_round_up(tn // 2, 8), 8)
    return tn


def radial_basis_forward(params, x, *, tile_rows: int = 1024, ln_eps: float = 1e-5):
    orig_shape = x.shape
    T = math.prod(orig_shape)
    H = params["w2"].shape[0]
    dim = params["w3"].shape[1]
    H2 = 2 * H
    D2 = 2 * dim
    Dp2 = _round_up(D2, 128)      # lane-dense packed output width

    # ---- weight prep (all layout plumbing / folding happens in XLA) --------
    g1 = params["g1"].reshape(H, 1)
    g2 = params["g2"].reshape(H, 1)
    w2_f = g1 * params["w2"]                       # fold LN1 gamma into w2
    w3_f = g2 * params["w3"]                       # fold LN2 gamma into w3
    zhh = jnp.zeros((H, H), jnp.float32)
    zhd = jnp.zeros((H, dim), jnp.float32)
    w2p = jnp.concatenate(
        [jnp.concatenate([w2_f, zhh], axis=1),
         jnp.concatenate([zhh, w2_f], axis=1)], axis=0).astype(jnp.bfloat16)
    w3p = jnp.concatenate(
        [jnp.concatenate([w3_f, zhd], axis=1),
         jnp.concatenate([zhd, w3_f], axis=1)], axis=0)       # [2H, 2*dim]
    b3p = jnp.tile(params["b3"].reshape(1, dim), (1, 2))
    if Dp2 != D2:
        w3p = jnp.pad(w3p, ((0, 0), (0, Dp2 - D2)))
        b3p = jnp.pad(b3p, ((0, 0), (0, Dp2 - D2)))
    w3p = w3p.astype(jnp.bfloat16)
    w1p = jnp.tile(params["w1"].reshape(1, H), (1, 2)).astype(jnp.float32)
    b1p = jnp.tile(params["b1"].reshape(1, H), (1, 2)).astype(jnp.float32)
    b2p = jnp.tile(params["b2"].reshape(1, H), (1, 2)).astype(jnp.float32)

    # ---- input packing: two logical elements per physical row --------------
    x_flat = x.astype(jnp.float32).reshape(-1)
    T_even = _round_up(T, 2)
    if T_even != T:
        x_flat = jnp.pad(x_flat, (0, T_even - T))
    Thalf = T_even // 2
    TN = _choose_row_tile(Thalf, tile_rows)
    Thalf_pad = _round_up(Thalf, TN)
    x_pack = x_flat.reshape(Thalf, 2)              # free row-major view
    if Thalf_pad != Thalf:
        x_pack = jnp.pad(x_pack, ((0, Thalf_pad - Thalf), (0, 0)))

    kernel = functools.partial(radial_basis_kernel, hidden=H, ln_eps=ln_eps)
    full = lambda shape: pl.BlockSpec(shape, lambda i: (0,) * len(shape))

    cost = pl.CostEstimate(
        flops=2 * T * (H * H + H * dim) + 24 * T * H,
        transcendentals=2 * T * H,
        bytes_accessed=4 * T + 4 * T * dim
        + 2 * (H2 * H2 + H2 * Dp2) + 16 * H2 + 4 * Dp2,
    )

    out = pl.pallas_call(
        kernel,
        out_shape=jax.ShapeDtypeStruct((Thalf_pad, Dp2), jnp.float32),
        grid_spec=pltpu.PrefetchScalarGridSpec(
            num_scalar_prefetch=0,
            grid=(Thalf_pad // TN,),
            in_specs=[
                pl.BlockSpec((TN, 2), lambda i: (i, 0)),   # packed x rows
                full((1, H2)),       # w1 (tiled)
                full((1, H2)),       # b1 (tiled)
                full((H2, H2)),      # w2 block-diag (bf16, gamma-folded)
                full((1, H2)),       # b2 (tiled)
                full((H2, Dp2)),     # w3 block-diag (bf16, gamma-folded, padded)
                full((1, Dp2)),      # b3 (tiled, padded)
            ],
            out_specs=pl.BlockSpec((TN, Dp2), lambda i: (i, 0)),
        ),
        compiler_params=pltpu.CompilerParams(
            dimension_semantics=("parallel",),
            vmem_limit_bytes=32 * 1024 * 1024,
        ),
        cost_estimate=cost,
    )(x_pack, w1p, b1p, w2p, b2p, w3p, b3p)

    # Unpack: [Thalf, 2*dim] -> [T_even, dim] is a free row-major view.
    out = out[:Thalf, :D2].reshape(T_even, dim)
    if T_even != T:
        out = out[:T]
    return out.reshape(orig_shape + (dim,))


# ---------------------------------------------------------------------------
# Pure-JAX f32 reference (module semantics) for the correctness check.
# ---------------------------------------------------------------------------
def radial_basis_reference(params, x, *, ln_eps: float = 1e-5):
    def ln(y, g):
        mu = y.mean(-1, keepdims=True)
        var = ((y - mu) ** 2).mean(-1, keepdims=True)
        return (y - mu) / jnp.sqrt(var + ln_eps) * g

    y = x.astype(jnp.float32)[..., None] * params["w1"][0] + params["b1"][0]
    y = y * jax.nn.sigmoid(y)
    y = ln(y, params["g1"][0])
    y = y @ params["w2"] + params["b2"][0]
    y = y * jax.nn.sigmoid(y)
    y = ln(y, params["g2"][0])
    return y @ params["w3"] + params["b3"][0]


# ---------------------------------------------------------------------------
# Deterministic parameter init (PyTorch nn.Linear-style uniform bounds,
# LayerNorm gamma = 1; weights stored as [in, out]).
# ---------------------------------------------------------------------------
def init_params(key, hidden_dim, out_dim):
    H, D = hidden_dim, out_dim
    ks = jax.random.split(key, 6)

    def linear(kw, kb, fan_in, fan_out):
        bound = 1.0 / math.sqrt(fan_in)
        w = jax.random.uniform(kw, (fan_in, fan_out), jnp.float32, -bound, bound)
        b = jax.random.uniform(kb, (1, fan_out), jnp.float32, -bound, bound)
        return w, b

    w1, b1 = linear(ks[0], ks[1], 1, H)
    w2, b2 = linear(ks[2], ks[3], H, H)
    w3, b3 = linear(ks[4], ks[5], H, D)
    return {
        "w1": w1, "b1": b1, "g1": jnp.ones((1, H), jnp.float32),
        "w2": w2, "b2": b2, "g2": jnp.ones((1, H), jnp.float32),
        "w3": w3, "b3": b3,
    }


if __name__ == "__main__":
    # x plays the role of pairwise radial distances: [B, N, M] scalars.
    B, N, M = 2, 8, 32
    HIDDEN = 64          # module default radial_hidden_dim
    DIM = 64             # 2*dim = 128 -> naturally lane-dense packed output

    key = jax.random.PRNGKey(0)
    kx, kp = jax.random.split(key)
    x = jax.random.uniform(kx, (B, N, M), jnp.float32, 0.0, 5.0)
    params = init_params(kp, HIDDEN, DIM)

    out = radial_basis_forward(params, x)
    out = jax.block_until_ready(out)

    ref = radial_basis_reference(params, x)

    assert out.shape == (B, N, M, DIM)
    assert bool(jnp.isfinite(out).all())
    # bf16 MXU operands (f32 accumulation) loosen agreement with the pure-f32
    # reference to ~1e-2 relative; documented tolerance for downstream users.
    assert jnp.allclose(out, ref, atol=5e-2, rtol=5e-2)

    print("KERNEL_OK")
</pallas_src>

<mosaic_0001>
module attributes {stable_mosaic.version = 11 : i64} {
  func.func @radial_basis_kernel(%arg0: i32, %arg1: memref<64x2xf32, #tpu.memory_space<vmem>>, %arg2: memref<1x128xf32, #tpu.memory_space<vmem>>, %arg3: memref<1x128xf32, #tpu.memory_space<vmem>>, %arg4: memref<128x128xbf16, #tpu.memory_space<vmem>>, %arg5: memref<1x128xf32, #tpu.memory_space<vmem>>, %arg6: memref<128x128xbf16, #tpu.memory_space<vmem>>, %arg7: memref<1x128xf32, #tpu.memory_space<vmem>>, %arg8: memref<64x128xf32, #tpu.memory_space<vmem>>) attributes {dimension_semantics = [#tpu.dimension_semantics<parallel>], iteration_bounds = array<i64: 4>, scalar_prefetch = 0 : i64, scratch_operands = 0 : i64, tpu.core_type = #tpu.core_type<tc>, window_params = [{transform_indices = @transform_0, window_bounds = array<i64: 64, 2>}, {pipeline_mode = #tpu.pipeline_mode<synchronous>, transform_indices = @transform_1, window_bounds = array<i64: 1, 128>}, {pipeline_mode = #tpu.pipeline_mode<synchronous>, transform_indices = @transform_2, window_bounds = array<i64: 1, 128>}, {pipeline_mode = #tpu.pipeline_mode<synchronous>, transform_indices = @transform_3, window_bounds = array<i64: 128, 128>}, {pipeline_mode = #tpu.pipeline_mode<synchronous>, transform_indices = @transform_4, window_bounds = array<i64: 1, 128>}, {pipeline_mode = #tpu.pipeline_mode<synchronous>, transform_indices = @transform_5, window_bounds = array<i64: 128, 128>}, {pipeline_mode = #tpu.pipeline_mode<synchronous>, transform_indices = @transform_6, window_bounds = array<i64: 1, 128>}, {transform_indices = @transform_7, window_bounds = array<i64: 64, 128>}]} {
    %0 = tpu.iota {dimensions = array<i32: 1>} : vector<64x128xi32>
    %c64_i32 = arith.constant 64 : i32
    %1 = vector.broadcast %c64_i32 : i32 to vector<64x128xi32>
    %2 = arith.cmpi slt, %0, %1 : vector<64x128xi32>
    %c0 = arith.constant 0 : index
    %c0_0 = arith.constant 0 : index
    %3 = vector.load %arg1[%c0, %c0_0] : memref<64x2xf32, #tpu.memory_space<vmem>>, vector<64x1xf32>
    %c0_1 = arith.constant 0 : index
    %c1 = arith.constant 1 : index
    %4 = vector.load %arg1[%c0_1, %c1] : memref<64x2xf32, #tpu.memory_space<vmem>>, vector<64x1xf32>
    %5 = vector.shape_cast %3 : vector<64x1xf32> to vector<64x1xf32>
    %6 = vector.broadcast %5 : vector<64x1xf32> to vector<64x128xf32>
    %7 = vector.shape_cast %4 : vector<64x1xf32> to vector<64x1xf32>
    %8 = vector.broadcast %7 : vector<64x1xf32> to vector<64x128xf32>
    %9 = arith.select %2, %6, %8 : vector<64x128xi1>, vector<64x128xf32>
    %c0_2 = arith.constant 0 : index
    %c0_3 = arith.constant 0 : index
    %10 = vector.load %arg2[%c0_2, %c0_3] : memref<1x128xf32, #tpu.memory_space<vmem>>, vector<1x128xf32>
    %11 = vector.broadcast %10 : vector<1x128xf32> to vector<64x128xf32>
    %12 = arith.mulf %9, %11 : vector<64x128xf32>
    %c0_4 = arith.constant 0 : index
    %c0_5 = arith.constant 0 : index
    %13 = vector.load %arg3[%c0_4, %c0_5] : memref<1x128xf32, #tpu.memory_space<vmem>>, vector<1x128xf32>
    %14 = vector.broadcast %13 : vector<1x128xf32> to vector<64x128xf32>
    %15 = arith.addf %12, %14 : vector<64x128xf32>
    %16 = arith.negf %15 : vector<64x128xf32>
    %17 = math.exp %16 : vector<64x128xf32>
    %cst = arith.constant 1.000000e+00 : f32
    %18 = vector.broadcast %cst : f32 to vector<64x128xf32>
    %19 = arith.addf %18, %17 : vector<64x128xf32>
    %20 = arith.divf %18, %19 : vector<64x128xf32>
    %21 = arith.mulf %15, %20 : vector<64x128xf32>
    %cst_6 = arith.constant 0.000000e+00 : f32
    %22 = vector.broadcast %cst_6 : f32 to vector<64x128xf32>
    %23 = arith.select %2, %21, %22 : vector<64x128xi1>, vector<64x128xf32>
    %24 = arith.mulf %21, %21 : vector<64x128xf32>
    %cst_7 = arith.constant 0.000000e+00 : f32
    %25 = vector.broadcast %cst_7 : f32 to vector<64x128xf32>
    %26 = arith.select %2, %24, %25 : vector<64x128xi1>, vector<64x128xf32>
    %cst_8 = arith.constant dense<0.000000e+00> : vector<64xf32>
    %27 = vector.multi_reduction <add>, %23, %cst_8 [1] : vector<64x128xf32> to vector<64xf32>
    %28 = vector.shape_cast %27 : vector<64xf32> to vector<64x1xf32>
    %cst_9 = arith.constant 1.562500e-02 : f32
    %29 = vector.broadcast %cst_9 : f32 to vector<64x1xf32>
    %30 = arith.mulf %28, %29 : vector<64x1xf32>
    %cst_10 = arith.constant dense<0.000000e+00> : vector<64xf32>
    %31 = vector.multi_reduction <add>, %21, %cst_10 [1] : vector<64x128xf32> to vector<64xf32>
    %32 = vector.shape_cast %31 : vector<64xf32> to vector<64x1xf32>
    %cst_11 = arith.constant 1.562500e-02 : f32
    %33 = vector.broadcast %cst_11 : f32 to vector<64x1xf32>
    %34 = arith.mulf %32, %33 : vector<64x1xf32>
    %35 = arith.subf %34, %30 : vector<64x1xf32>
    %cst_12 = arith.constant dense<0.000000e+00> : vector<64xf32>
    %36 = vector.multi_reduction <add>, %26, %cst_12 [1] : vector<64x128xf32> to vector<64xf32>
    %37 = vector.shape_cast %36 : vector<64xf32> to vector<64x1xf32>
    %cst_13 = arith.constant 1.562500e-02 : f32
    %38 = vector.broadcast %cst_13 : f32 to vector<64x1xf32>
    %39 = arith.mulf %37, %38 : vector<64x1xf32>
    %cst_14 = arith.constant dense<0.000000e+00> : vector<64xf32>
    %40 = vector.multi_reduction <add>, %24, %cst_14 [1] : vector<64x128xf32> to vector<64xf32>
    %41 = vector.shape_cast %40 : vector<64xf32> to vector<64x1xf32>
    %cst_15 = arith.constant 1.562500e-02 : f32
    %42 = vector.broadcast %cst_15 : f32 to vector<64x1xf32>
    %43 = arith.mulf %41, %42 : vector<64x1xf32>
    %44 = arith.subf %43, %39 : vector<64x1xf32>
    %45 = arith.mulf %30, %30 : vector<64x1xf32>
    %46 = arith.subf %39, %45 : vector<64x1xf32>
    %cst_16 = arith.constant 0.000000e+00 : f32
    %47 = vector.broadcast %cst_16 : f32 to vector<64x1xf32>
    %48 = arith.maximumf %46, %47 : vector<64x1xf32>
    %cst_17 = arith.constant 9.99999974E-6 : f32
    %49 = vector.broadcast %cst_17 : f32 to vector<64x1xf32>
    %50 = arith.addf %48, %49 : vector<64x1xf32>
    %51 = math.rsqrt %50 : vector<64x1xf32>
    %52 = arith.mulf %35, %35 : vector<64x1xf32>
    %53 = arith.subf %44, %52 : vector<64x1xf32>
    %cst_18 = arith.constant 0.000000e+00 : f32
    %54 = vector.broadcast %cst_18 : f32 to vector<64x1xf32>
    %55 = arith.maximumf %53, %54 : vector<64x1xf32>
    %cst_19 = arith.constant 9.99999974E-6 : f32
    %56 = vector.broadcast %cst_19 : f32 to vector<64x1xf32>
    %57 = arith.addf %55, %56 : vector<64x1xf32>
    %58 = math.rsqrt %57 : vector<64x1xf32>
    %59 = vector.shape_cast %30 : vector<64x1xf32> to vector<64x1xf32>
    %60 = vector.broadcast %59 : vector<64x1xf32> to vector<64x128xf32>
    %61 = vector.shape_cast %35 : vector<64x1xf32> to vector<64x1xf32>
    %62 = vector.broadcast %61 : vector<64x1xf32> to vector<64x128xf32>
    %63 = arith.select %2, %60, %62 : vector<64x128xi1>, vector<64x128xf32>
    %64 = vector.shape_cast %51 : vector<64x1xf32> to vector<64x1xf32>
    %65 = vector.broadcast %64 : vector<64x1xf32> to vector<64x128xf32>
    %66 = vector.shape_cast %58 : vector<64x1xf32> to vector<64x1xf32>
    %67 = vector.broadcast %66 : vector<64x1xf32> to vector<64x128xf32>
    %68 = arith.select %2, %65, %67 : vector<64x128xi1>, vector<64x128xf32>
    %69 = arith.subf %21, %63 : vector<64x128xf32>
    %70 = arith.mulf %69, %68 : vector<64x128xf32>
    %71 = arith.truncf %70 : vector<64x128xf32> to vector<64x128xbf16>
    %c0_20 = arith.constant 0 : index
    %c0_21 = arith.constant 0 : index
    %72 = vector.load %arg4[%c0_20, %c0_21] : memref<128x128xbf16, #tpu.memory_space<vmem>>, vector<128x128xbf16>
    %cst_22 = arith.constant dense<0.000000e+00> : vector<64x128xf32>
    %73 = tpu.matmul %71, %72, %cst_22 {dimension_numbers = #tpu.dot_dimension_numbers<[1], [0], [0], [1], [0, 0, 1, 1], [], []>} : vector<64x128xbf16>, vector<128x128xbf16>, vector<64x128xf32> -> vector<64x128xf32>
    %c0_23 = arith.constant 0 : index
    %c0_24 = arith.constant 0 : index
    %74 = vector.load %arg5[%c0_23, %c0_24] : memref<1x128xf32, #tpu.memory_space<vmem>>, vector<1x128xf32>
    %75 = vector.broadcast %74 : vector<1x128xf32> to vector<64x128xf32>
    %76 = arith.addf %73, %75 : vector<64x128xf32>
    %77 = arith.negf %76 : vector<64x128xf32>
    %78 = math.exp %77 : vector<64x128xf32>
    %cst_25 = arith.constant 1.000000e+00 : f32
    %79 = vector.broadcast %cst_25 : f32 to vector<64x128xf32>
    %80 = arith.addf %79, %78 : vector<64x128xf32>
    %81 = arith.divf %79, %80 : vector<64x128xf32>
    %82 = arith.mulf %76, %81 : vector<64x128xf32>
    %cst_26 = arith.constant 0.000000e+00 : f32
    %83 = vector.broadcast %cst_26 : f32 to vector<64x128xf32>
    %84 = arith.select %2, %82, %83 : vector<64x128xi1>, vector<64x128xf32>
    %85 = arith.mulf %82, %82 : vector<64x128xf32>
    %cst_27 = arith.constant 0.000000e+00 : f32
    %86 = vector.broadcast %cst_27 : f32 to vector<64x128xf32>
    %87 = arith.select %2, %85, %86 : vector<64x128xi1>, vector<64x128xf32>
    %cst_28 = arith.constant dense<0.000000e+00> : vector<64xf32>
    %88 = vector.multi_reduction <add>, %84, %cst_28 [1] : vector<64x128xf32> to vector<64xf32>
    %89 = vector.shape_cast %88 : vector<64xf32> to vector<64x1xf32>
    %cst_29 = arith.constant 1.562500e-02 : f32
    %90 = vector.broadcast %cst_29 : f32 to vector<64x1xf32>
    %91 = arith.mulf %89, %90 : vector<64x1xf32>
    %cst_30 = arith.constant dense<0.000000e+00> : vector<64xf32>
    %92 = vector.multi_reduction <add>, %82, %cst_30 [1] : vector<64x128xf32> to vector<64xf32>
    %93 = vector.shape_cast %92 : vector<64xf32> to vector<64x1xf32>
    %cst_31 = arith.constant 1.562500e-02 : f32
    %94 = vector.broadcast %cst_31 : f32 to vector<64x1xf32>
    %95 = arith.mulf %93, %94 : vector<64x1xf32>
    %96 = arith.subf %95, %91 : vector<64x1xf32>
    %cst_32 = arith.constant dense<0.000000e+00> : vector<64xf32>
    %97 = vector.multi_reduction <add>, %87, %cst_32 [1] : vector<64x128xf32> to vector<64xf32>
    %98 = vector.shape_cast %97 : vector<64xf32> to vector<64x1xf32>
    %cst_33 = arith.constant 1.562500e-02 : f32
    %99 = vector.broadcast %cst_33 : f32 to vector<64x1xf32>
    %100 = arith.mulf %98, %99 : vector<64x1xf32>
    %cst_34 = arith.constant dense<0.000000e+00> : vector<64xf32>
    %101 = vector.multi_reduction <add>, %85, %cst_34 [1] : vector<64x128xf32> to vector<64xf32>
    %102 = vector.shape_cast %101 : vector<64xf32> to vector<64x1xf32>
    %cst_35 = arith.constant 1.562500e-02 : f32
    %103 = vector.broadcast %cst_35 : f32 to vector<64x1xf32>
    %104 = arith.mulf %102, %103 : vector<64x1xf32>
    %105 = arith.subf %104, %100 : vector<64x1xf32>
    %106 = arith.mulf %91, %91 : vector<64x1xf32>
    %107 = arith.subf %100, %106 : vector<64x1xf32>
    %cst_36 = arith.constant 0.000000e+00 : f32
    %108 = vector.broadcast %cst_36 : f32 to vector<64x1xf32>
    %109 = arith.maximumf %107, %108 : vector<64x1xf32>
    %cst_37 = arith.constant 9.99999974E-6 : f32
    %110 = vector.broadcast %cst_37 : f32 to vector<64x1xf32>
    %111 = arith.addf %109, %110 : vector<64x1xf32>
    %112 = math.rsqrt %111 : vector<64x1xf32>
    %113 = arith.mulf %96, %96 : vector<64x1xf32>
    %114 = arith.subf %105, %113 : vector<64x1xf32>
    %cst_38 = arith.constant 0.000000e+00 : f32
    %115 = vector.broadcast %cst_38 : f32 to vector<64x1xf32>
    %116 = arith.maximumf %114, %115 : vector<64x1xf32>
    %cst_39 = arith.constant 9.99999974E-6 : f32
    %117 = vector.broadcast %cst_39 : f32 to vector<64x1xf32>
    %118 = arith.addf %116, %117 : vector<64x1xf32>
    %119 = math.rsqrt %118 : vector<64x1xf32>
    %120 = vector.shape_cast %91 : vector<64x1xf32> to vector<64x1xf32>
    %121 = vector.broadcast %120 : vector<64x1xf32> to vector<64x128xf32>
    %122 = vector.shape_cast %96 : vector<64x1xf32> to vector<64x1xf32>
    %123 = vector.broadcast %122 : vector<64x1xf32> to vector<64x128xf32>
    %124 = arith.select %2, %121, %123 : vector<64x128xi1>, vector<64x128xf32>
    %125 = vector.shape_cast %112 : vector<64x1xf32> to vector<64x1xf32>
    %126 = vector.broadcast %125 : vector<64x1xf32> to vector<64x128xf32>
    %127 = vector.shape_cast %119 : vector<64x1xf32> to vector<64x1xf32>
    %128 = vector.broadcast %127 : vector<64x1xf32> to vector<64x128xf32>
    %129 = arith.select %2, %126, %128 : vector<64x128xi1>, vector<64x128xf32>
    %130 = arith.subf %82, %124 : vector<64x128xf32>
    %131 = arith.mulf %130, %129 : vector<64x128xf32>
    %132 = arith.truncf %131 : vector<64x128xf32> to vector<64x128xbf16>
    %c0_40 = arith.constant 0 : index
    %c0_41 = arith.constant 0 : index
    %133 = vector.load %arg6[%c0_40, %c0_41] : memref<128x128xbf16, #tpu.memory_space<vmem>>, vector<128x128xbf16>
    %cst_42 = arith.constant dense<0.000000e+00> : vector<64x128xf32>
    %134 = tpu.matmul %132, %133, %cst_42 {dimension_numbers = #tpu.dot_dimension_numbers<[1], [0], [0], [1], [0, 0, 1, 1], [], []>} : vector<64x128xbf16>, vector<128x128xbf16>, vector<64x128xf32> -> vector<64x128xf32>
    %c0_43 = arith.constant 0 : index
    %c0_44 = arith.constant 0 : index
    %135 = vector.load %arg7[%c0_43, %c0_44] : memref<1x128xf32, #tpu.memory_space<vmem>>, vector<1x128xf32>
    %136 = vector.broadcast %135 : vector<1x128xf32> to vector<64x128xf32>
    %137 = arith.addf %134, %136 : vector<64x128xf32>
    %c0_45 = arith.constant 0 : index
    %c0_46 = arith.constant 0 : index
    %138 = vector.load %arg8[%c0_45, %c0_46] : memref<64x128xf32, #tpu.memory_space<vmem>>, vector<64x128xf32>
    tpu.vector_store %arg8[%c0_45, %c0_46], %137 {strides = array<i32>} : memref<64x128xf32, #tpu.memory_space<vmem>>, vector<64x128xf32>,
    return
  }
  func.func @transform_0(%arg0: i32) -> (i32, i32) {
    %c0_i32 = arith.constant 0 : i32
    %c0_i32_0 = arith.constant 0 : i32
    return %arg0, %c0_i32 : i32, i32
  }
  func.func @transform_1(%arg0: i32) -> (i32, i32) {
    %c0_i32 = arith.constant 0 : i32
    %c0_i32_0 = arith.constant 0 : i32
    %c0_i32_1 = arith.constant 0 : i32
    return %c0_i32, %c0_i32_0 : i32, i32
  }
  func.func @transform_2(%arg0: i32) -> (i32, i32) {
    %c0_i32 = arith.constant 0 : i32
    %c0_i32_0 = arith.constant 0 : i32
    %c0_i32_1 = arith.constant 0 : i32
    return %c0_i32, %c0_i32_0 : i32, i32
  }
  func.func @transform_3(%arg0: i32) -> (i32, i32) {
    %c0_i32 = arith.constant 0 : i32
    %c0_i32_0 = arith.constant 0 : i32
    %c0_i32_1 = arith.constant 0 : i32
    return %c0_i32, %c0_i32_0 : i32, i32
  }
  func.func @transform_4(%arg0: i32) -> (i32, i32) {
    %c0_i32 = arith.constant 0 : i32
    %c0_i32_0 = arith.constant 0 : i32
    %c0_i32_1 = arith.constant 0 : i32
    return %c0_i32, %c0_i32_0 : i32, i32
  }
  func.func @transform_5(%arg0: i32) -> (i32, i32) {
    %c0_i32 = arith.constant 0 : i32
    %c0_i32_0 = arith.constant 0 : i32
    %c0_i32_1 = arith.constant 0 : i32
    return %c0_i32, %c0_i32_0 : i32, i32
  }
  func.func @transform_6(%arg0: i32) -> (i32, i32) {
    %c0_i32 = arith.constant 0 : i32
    %c0_i32_0 = arith.constant 0 : i32
    %c0_i32_1 = arith.constant 0 : i32
    return %c0_i32, %c0_i32_0 : i32, i32
  }
  func.func @transform_7(%arg0: i32) -> (i32, i32) {
    %c0_i32 = arith.constant 0 : i32
    %c0_i32_0 = arith.constant 0 : i32
    return %arg0, %c0_i32 : i32, i32
  }
}

</mosaic_0001>

<llo_original>
// kernel: tpu_custom_call.1
$region0: #{tpu_custom_call.1}
  #allocation0 [shape = 'u32[]', space=smem, size = 0x4, offset = 0x4, fixed_abs, tag = 'smem constant byte address 0x4 - core index']
  #allocation1 [shape = 'u32[72,128]{1,0:T(1,128)}', space=vmem, size = 0x9000, scoped, tag = 'internal scratch']
  %s0 = inlined_call_operand.vmem [shape: f32[256,2], index: 0, kind: input, shape index: {}]
  %s1 = inlined_call_operand.vmem [shape: f32[1,128], index: 1, kind: input, shape index: {}]
  %s2 = inlined_call_operand.vmem [shape: f32[1,128], index: 2, kind: input, shape index: {}]
  %s3 = inlined_call_operand.vmem [shape: bf16[128,128], index: 3, kind: input, shape index: {}]
  %s4 = inlined_call_operand.vmem [shape: f32[1,128], index: 4, kind: input, shape index: {}]
  %s5 = inlined_call_operand.vmem [shape: bf16[128,128], index: 5, kind: input, shape index: {}]
  %s6 = inlined_call_operand.vmem [shape: f32[1,128], index: 6, kind: input, shape index: {}]
  %s7 = inlined_call_operand.hbm [shape: f32[256,128], index: 7, kind: output, shape index: {}]
  %s8 = sld [smem:[#allocation0]]
  $region61: #{tpu_custom_call.1} parent=0
    _
  %s10 = ssub.s32 1, %s8
  %s11 = scalar_select 0, %s10, %s8
  $region1: #{tpu_custom_call.1} parent=0
    #allocation2 [shape = 'u8[65536]{0}', space=vmem, size = 0x10000, scoped, tag = 'output window, operand 0']
    #allocation3 [shape = 's32[2]{0}', space=sflag, size = 0x8, scoped, tag = 'scoped memory for tpu_custom_call.1']
    %12 = vsyncpa [#allocation3], 0
    %s13 = scalar_lea.sflag [#allocation3], 1
    %14 = vsyncpa %s13, 0
    loop: start=0, step=1, limit=6
    $region2: #{tpu_custom_call.1} parent=1 // loop_pre_header
      _
    $region3: #{tpu_custom_call.1} parent=1 // loop_header
      %s16 = sphi 0, %s20
      %p17 = scmp.ge.s32.totalorder %s16, 6
      %s26 = sphi 0, %s28
      %s29 = sphi 0, %s26
      %s30 = sphi 0, %s29
      %s46 = sphi 0, %s30
      %s50 = sphi 0, %s50
      %s52 = sphi 0, %s50
      %s53 = sphi 0, %s52
      %s67 = sphi 0, %s53
      %s71 = sphi 0, %s71
      %s73 = sphi 0, %s71
      %s74 = sphi 0, %s73
      %s88 = sphi 0, %s74
      %s92 = sphi 0, %s92
      %s94 = sphi 0, %s92
      %s95 = sphi 0, %s94
      %s109 = sphi 0, %s95
      %s113 = sphi 0, %s113
      %s115 = sphi 0, %s113
      %s116 = sphi 0, %s115
      %s130 = sphi 0, %s116
      %s134 = sphi 0, %s134
      %s136 = sphi 0, %s134
      %s137 = sphi 0, %s136
      %s151 = sphi 0, %s137
      %s155 = sphi 0, %s155
      %s157 = sphi 0, %s155
      %s158 = sphi 0, %s157
      %s172 = sphi 0, %s158
      %s178 = sphi 0, %s180
      %s181 = sphi 0, %s178
      %s182 = sphi 0, %s181
      %s198 = sphi 0, %s182
    $region4: #{tpu_custom_call.1} parent=1 // loop_header_branch
      %19 = sbr.rel (%p17) target = $region8
    $region5: #{tpu_custom_call.1} parent=1 // loop_body
      %s21 = ssub.s32 %s16, 1
      %s22 = ssub.s32 %s16, 2
      %s23 = sadd.s32 %s16, 1
      %s24 = ssub.s32 %s16, %s23
      %p25 = scmp.eq.s32.totalorder %s24, 0
      %s27 = sadd.s32 %s26, 1
      %s28 = scalar_select %p25, %s26, %s27
      %p31 = pneg %p25
      %p32 = scmp.eq.s32.totalorder %s16, 3
      %p33 = por %p31, %p32
      %p34 = scmp.ne.s32.totalorder %s26, %s29
      %p35 = scmp.eq.s32.totalorder %s16, 0
      %p36 = por %p34, %p35
      %p37 = scmp.ne.s32.totalorder %s26, %s29
      %p38 = scmp.eq.s32.totalorder %s21, 3
      %p39 = por %p37, %p38
      %p40 = scmp.ne.s32.totalorder %s29, %s30
      %p41 = scmp.eq.s32.totalorder %s21, 0
      %p42 = por %p40, %p41
      %p43 = scmp.ne.s32.totalorder %s29, %s30
      %p44 = scmp.eq.s32.totalorder %s22, 3
      %p45 = por %p43, %p44
      %p47 = scmp.ne.s32.totalorder %s30, %s46
      %p48 = scmp.eq.s32.totalorder %s22, 0
      %p49 = por %p47, %p48
      %s51 = sadd.s32 %s50, 1
      %p54 = scmp.eq.s32.totalorder %s16, 3
      %p55 = scmp.ne.s32.totalorder %s50, %s52
      %p56 = scmp.eq.s32.totalorder %s16, 0
      %p57 = por %p55, %p56
      %p58 = scmp.ne.s32.totalorder %s50, %s52
      %p59 = scmp.eq.s32.totalorder %s21, 3
      %p60 = por %p58, %p59
      %p61 = scmp.ne.s32.totalorder %s52, %s53
      %p62 = scmp.eq.s32.totalorder %s21, 0
      %p63 = por %p61, %p62
      %p64 = scmp.ne.s32.totalorder %s52, %s53
      %p65 = scmp.eq.s32.totalorder %s22, 3
      %p66 = por %p64, %p65
      %p68 = scmp.ne.s32.totalorder %s53, %s67
      %p69 = scmp.eq.s32.totalorder %s22, 0
      %p70 = por %p68, %p69
      %s72 = sadd.s32 %s71, 1
      %p75 = scmp.eq.s32.totalorder %s16, 3
      %p76 = scmp.ne.s32.totalorder %s71, %s73
      %p77 = scmp.eq.s32.totalorder %s16, 0
      %p78 = por %p76, %p77
      %p79 = scmp.ne.s32.totalorder %s71, %s73
      %p80 = scmp.eq.s32.totalorder %s21, 3
      %p81 = por %p79, %p80
      %p82 = scmp.ne.s32.totalorder %s73, %s74
      %p83 = scmp.eq.s32.totalorder %s21, 0
      %p84 = por %p82, %p83
      %p85 = scmp.ne.s32.totalorder %s73, %s74
      %p86 = scmp.eq.s32.totalorder %s22, 3
      %p87 = por %p85, %p86
      %p89 = scmp.ne.s32.totalorder %s74, %s88
      %p90 = scmp.eq.s32.totalorder %s22, 0
      %p91 = por %p89, %p90
      %s93 = sadd.s32 %s92, 1
      %p96 = scmp.eq.s32.totalorder %s16, 3
      %p97 = scmp.ne.s32.totalorder %s92, %s94
      %p98 = scmp.eq.s32.totalorder %s16, 0
      %p99 = por %p97, %p98
      %p100 = scmp.ne.s32.totalorder %s92, %s94
      %p101 = scmp.eq.s32.totalorder %s21, 3
      %p102 = por %p100, %p101
      %p103 = scmp.ne.s32.totalorder %s94, %s95
      %p104 = scmp.eq.s32.totalorder %s21, 0
      %p105 = por %p103, %p104
      %p106 = scmp.ne.s32.totalorder %s94, %s95
      %p107 = scmp.eq.s32.totalorder %s22, 3
      %p108 = por %p106, %p107
      %p110 = scmp.ne.s32.totalorder %s95, %s109
      %p111 = scmp.eq.s32.totalorder %s22, 0
      %p112 = por %p110, %p111
      %s114 = sadd.s32 %s113, 1
      %p117 = scmp.eq.s32.totalorder %s16, 3
      %p118 = scmp.ne.s32.totalorder %s113, %s115
      %p119 = scmp.eq.s32.totalorder %s16, 0
      %p120 = por %p118, %p119
      %p121 = scmp.ne.s32.totalorder %s113, %s115
      %p122 = scmp.eq.s32.totalorder %s21, 3
      %p123 = por %p121, %p122
      %p124 = scmp.ne.s32.totalorder %s115, %s116
      %p125 = scmp.eq.s32.totalorder %s21, 0
      %p126 = por %p124, %p125
      %p127 = scmp.ne.s32.totalorder %s115, %s116
      %p128 = scmp.eq.s32.totalorder %s22, 3
      %p129 = por %p127, %p128
      %p131 = scmp.ne.s32.totalorder %s116, %s130
      %p132 = scmp.eq.s32.totalorder %s22, 0
      %p133 = por %p131, %p132
      %s135 = sadd.s32 %s134, 1
      %p138 = scmp.eq.s32.totalorder %s16, 3
      %p139 = scmp.ne.s32.totalorder %s134, %s136
      %p140 = scmp.eq.s32.totalorder %s16, 0
      %p141 = por %p139, %p140
      %p142 = scmp.ne.s32.totalorder %s134, %s136
      %p143 = scmp.eq.s32.totalorder %s21, 3
      %p144 = por %p142, %p143
      %p145 = scmp.ne.s32.totalorder %s136, %s137
      %p146 = scmp.eq.s32.totalorder %s21, 0
      %p147 = por %p145, %p146
      %p148 = scmp.ne.s32.totalorder %s136, %s137
      %p149 = scmp.eq.s32.totalorder %s22, 3
      %p150 = por %p148, %p149
      %p152 = scmp.ne.s32.totalorder %s137, %s151
      %p153 = scmp.eq.s32.totalorder %s22, 0
      %p154 = por %p152, %p153
      %s156 = sadd.s32 %s155, 1
      %p159 = scmp.eq.s32.totalorder %s16, 3
      %p160 = scmp.ne.s32.totalorder %s155, %s157
      %p161 = scmp.eq.s32.totalorder %s16, 0
      %p162 = por %p160, %p161
      %p163 = scmp.ne.s32.totalorder %s155, %s157
      %p164 = scmp.eq.s32.totalorder %s21, 3
      %p165 = por %p163, %p164
      %p166 = scmp.ne.s32.totalorder %s157, %s158
      %p167 = scmp.eq.s32.totalorder %s21, 0
      %p168 = por %p166, %p167
      %p169 = scmp.ne.s32.totalorder %s157, %s158
      %p170 = scmp.eq.s32.totalorder %s22, 3
      %p171 = por %p169, %p170
      %p173 = scmp.ne.s32.totalorder %s158, %s172
      %p174 = scmp.eq.s32.totalorder %s22, 0
      %p175 = por %p173, %p174
      %s176 = ssub.s32 %s16, %s23
      %p177 = scmp.eq.s32.totalorder %s176, 0
      %s179 = sadd.s32 %s178, 1
      %s180 = scalar_select %p177, %s178, %s179
      %p183 = pneg %p177
      %p184 = scmp.eq.s32.totalorder %s16, 3
      %p185 = por %p183, %p184
      %p186 = scmp.ne.s32.totalorder %s178, %s181
      %p187 = scmp.eq.s32.totalorder %s16, 0
      %p188 = por %p186, %p187
      %p189 = scmp.ne.s32.totalorder %s178, %s181
      %p190 = scmp.eq.s32.totalorder %s21, 3
      %p191 = por %p189, %p190
      %p192 = scmp.ne.s32.totalorder %s181, %s182
      %p193 = scmp.eq.s32.totalorder %s21, 0
      %p194 = por %p192, %p193
      %p195 = scmp.ne.s32.totalorder %s181, %s182
      %p196 = scmp.eq.s32.totalorder %s22, 3
      %p197 = por %p195, %p196
      %p199 = scmp.ne.s32.totalorder %s182, %s198
      %p200 = scmp.eq.s32.totalorder %s22, 0
      %p201 = por %p199, %p200
      %p202 = scmp.le.s32.totalorder 1, %s16
      %p203 = scmp.lt.s32.totalorder %s16, 5
      %p204 = pnand %p202, %p203
      %p205 = pneg %p204
      // Predicated region
      $region9: #{tpu_custom_call.1} parent=5 // pred_check
        _
      $region10: #{tpu_custom_call.1} parent=5 // pred_check_branch
        %207 = sbr.rel (%p204) target = $region12
      $region11: #{tpu_custom_call.1} parent=5 // pred_region
        %s208 = ssub.s32 %s16, 1
        // Predicated region
        $region13: #{tpu_custom_call.1} parent=11 // pred_check
          %p209 = pneg %p63
        $region14: #{tpu_custom_call.1} parent=11 // pred_check_branch
          %211 = sbr.rel (%p209) target = $region16
        $region15: #{tpu_custom_call.1} parent=11 // pred_region
          _
        $region16: #{tpu_custom_call.1} parent=11 // pred_fallthru
          _
        // Predicated region
        $region17: #{tpu_custom_call.1} parent=11 // pred_check
          %p212 = pneg %p84
        $region18: #{tpu_custom_call.1} parent=11 // pred_check_branch
          %214 = sbr.rel (%p212) target = $region20
        $region19: #{tpu_custom_call.1} parent=11 // pred_region
          _
        $region20: #{tpu_custom_call.1} parent=11 // pred_fallthru
          _
        // Predicated region
        $region21: #{tpu_custom_call.1} parent=11 // pred_check
          %p215 = pneg %p105
        $region22: #{tpu_custom_call.1} parent=11 // pred_check_branch
          %217 = sbr.rel (%p215) target = $region24
        $region23: #{tpu_custom_call.1} parent=11 // pred_region
          _
        $region24: #{tpu_custom_call.1} parent=11 // pred_fallthru
          _
        // Predicated region
        $region25: #{tpu_custom_call.1} parent=11 // pred_check
          %p218 = pneg %p126
        $region26: #{tpu_custom_call.1} parent=11 // pred_check_branch
          %220 = sbr.rel (%p218) target = $region28
        $region27: #{tpu_custom_call.1} parent=11 // pred_region
          _
        $region28: #{tpu_custom_call.1} parent=11 // pred_fallthru
          _
        // Predicated region
        $region29: #{tpu_custom_call.1} parent=11 // pred_check
          %p221 = pneg %p147
        $region30: #{tpu_custom_call.1} parent=11 // pred_check_branch
          %223 = sbr.rel (%p221) target = $region32
        $region31: #{tpu_custom_call.1} parent=11 // pred_region
          _
        $region32: #{tpu_custom_call.1} parent=11 // pred_fallthru
          _
        // Predicated region
        $region33: #{tpu_custom_call.1} parent=11 // pred_check
          %p224 = pneg %p168
        $region34: #{tpu_custom_call.1} parent=11 // pred_check_branch
          %226 = sbr.rel (%p224) target = $region36
        $region35: #{tpu_custom_call.1} parent=11 // pred_region
          _
        $region36: #{tpu_custom_call.1} parent=11 // pred_fallthru
          _
      $region12: #{tpu_custom_call.1} parent=5 // pred_fallthru
        _
      %p227 = scmp.lt.s32.totalorder %s16, 4
      // Predicated region
      $region37: #{tpu_custom_call.1} parent=5 // pred_check
        %p228 = pneg %p227
      $region38: #{tpu_custom_call.1} parent=5 // pred_check_branch
        %230 = sbr.rel (%p228) target = $region40
      $region39: #{tpu_custom_call.1} parent=5 // pred_region
        // Predicated region
        $region41: #{tpu_custom_call.1} parent=39 // pred_check
          %p231 = pneg %p36
        $region42: #{tpu_custom_call.1} parent=39 // pred_check_branch
          %233 = sbr.rel (%p231) target = $region44
        $region43: #{tpu_custom_call.1} parent=39 // pred_region
          %s234 = smul.u32 8, %s16
          %p235 = scmp.lt.s32.totalorder %s234, 31
          %s236 = scalar_select %p235, %s234, 31
          %s237 = smul.addr %s236, 8
          %s238 = scalar_lea.vmem %s0, %s237
          %s239 = smul.u32 8, %s16
        $region44: #{tpu_custom_call.1} parent=39 // pred_fallthru
          _
      $region40: #{tpu_custom_call.1} parent=5 // pred_fallthru
        _
      %p240 = scmp.le.s32.totalorder 1, %s16
      %p241 = scmp.lt.s32.totalorder %s16, 5
      %p242 = pnand %p240, %p241
      %p243 = pneg %p242
      // Predicated region
      $region45: #{tpu_custom_call.1} parent=5 // pred_check
        _
      $region46: #{tpu_custom_call.1} parent=5 // pred_check_branch
        %245 = sbr.rel (%p242) target = $region48
      $region47: #{tpu_custom_call.1} parent=5 // pred_region
        %s246 = ssub.s32 %s16, 1
        %s247 = smul.u32 8, %s21
        %p248 = scmp.lt.s32.totalorder %s247, 31
        %s249 = scalar_select %p248, %s247, 31
        %s250 = smul.addr %s249, 8
        %s251 = scalar_lea.vmem %s0, %s250
        %p252 = pneg %p42
        %p253 = pneg %p39
        %p254 = pneg %p63
        %p255 = pneg %p60
        %p256 = pneg %p84
        %p257 = pneg %p81
        %p258 = pneg %p105
        %p259 = pneg %p102
        %p260 = pneg %p126
        %p261 = pneg %p123
        %p262 = pneg %p147
        %p263 = pneg %p144
        %p264 = pneg %p168
        %p265 = pneg %p165
        %p266 = pneg %p194
        %p267 = pneg %p191
        %s268 = sand.u32 %s181, 1
        %s269 = scalar_lea.sflag [#allocation3], %s268
        %s270 = sand.u32 %s181, 1
        %s271 = smul.addr %s270, 64
        %s272 = scalar_lea.vmem [#allocation2], %s271
        %s273 = smul.u32 8, %s21
        %p274 = scmp.lt.s32.totalorder %s273, 31
        %s275 = scalar_select %p274, %s273, 31
        %s276 = smul.addr %s275, 8
        %s277 = scalar_lea.vmem %s0, %s276
        %s278 = smul.u32 8, %s21
        %s279 = smul.u32 8, %s21
        %v280 = vlaneseq
        %v281 = vand.u32 %v280, 127
        %vm282 = vcmp.lt.s32.totalorder %v281, 64
        %v283 = vld [vmem:[%s277] sm:$0xff]
        %v284 = vld [vmem:[%s277 + $0x8] sm:$0xff]
        %v285 = vld [vmem:[%s277 + $0x10] sm:$0xff]
        %v286 = vld [vmem:[%s277 + $0x18] sm:$0xff]
        %v287 = vld [vmem:[%s277 + $0x20] sm:$0xff]
        %v288 = vld [vmem:[%s277 + $0x28] sm:$0xff]
        %v289 = vld [vmem:[%s277 + $0x30] sm:$0xff]
        %v290 = vld [vmem:[%s277 + $0x38] sm:$0xff]
        %292 = vset.pattern.permute.xlu0 0
        %293 = vperm.xlu0 %292, %v283
        %v294 = vpop.permute.xlu0 %293
        %297 = vset.pattern.permute.xlu0 0
        %298 = vperm.xlu0 %297, %v284
        %v299 = vpop.permute.xlu0 %298
        %302 = vset.pattern.permute.xlu0 0
        %303 = vperm.xlu0 %302, %v285
        %v304 = vpop.permute.xlu0 %303
        %307 = vset.pattern.permute.xlu0 0
        %308 = vperm.xlu0 %307, %v286
        %v309 = vpop.permute.xlu0 %308
        %312 = vset.pattern.permute.xlu0 0
        %313 = vperm.xlu0 %312, %v287
        %v314 = vpop.permute.xlu0 %313
        %317 = vset.pattern.permute.xlu0 0
        %318 = vperm.xlu0 %317, %v288
        %v319 = vpop.permute.xlu0 %318
        %322 = vset.pattern.permute.xlu0 0
        %323 = vperm.xlu0 %322, %v289
        %v324 = vpop.permute.xlu0 %323
        %327 = vset.pattern.permute.xlu0 0
        %328 = vperm.xlu0 %327, %v290
        %v329 = vpop.permute.xlu0 %328
        %331 = vset.pattern.permute.xlu0 1
        %332 = vperm.xlu0 %331, %v283
        %v333 = vpop.permute.xlu0 %332
        %335 = vset.pattern.permute.xlu0 1
        %336 = vperm.xlu0 %335, %v284
        %v337 = vpop.permute.xlu0 %336
        %339 = vset.pattern.permute.xlu0 1
        %340 = vperm.xlu0 %339, %v285
        %v341 = vpop.permute.xlu0 %340
        %343 = vset.pattern.permute.xlu0 1
        %344 = vperm.xlu0 %343, %v286
        %v345 = vpop.permute.xlu0 %344
        %347 = vset.pattern.permute.xlu0 1
        %348 = vperm.xlu0 %347, %v287
        %v349 = vpop.permute.xlu0 %348
        %351 = vset.pattern.permute.xlu0 1
        %352 = vperm.xlu0 %351, %v288
        %v353 = vpop.permute.xlu0 %352
        %355 = vset.pattern.permute.xlu0 1
        %356 = vperm.xlu0 %355, %v289
        %v357 = vpop.permute.xlu0 %356
        %359 = vset.pattern.permute.xlu0 1
        %360 = vperm.xlu0 %359, %v290
        %v361 = vpop.permute.xlu0 %360
        %v363 = vsel %vm282, %v294, %v333
        %v364 = vsel %vm282, %v299, %v337
        %v365 = vsel %vm282, %v304, %v341
        %v366 = vsel %vm282, %v309, %v345
        %v367 = vsel %vm282, %v314, %v349
        %v368 = vsel %vm282, %v319, %v353
        %v369 = vsel %vm282, %v324, %v357
        %v370 = vsel %vm282, %v329, %v361
        %v371 = vld [vmem:[%s1] sm:$0x1]
        %v373 = vperm.slane %v371, 0
        %v375 = vmul.f32 %v363, %v373
        %v376 = vmul.f32 %v364, %v373
        %v377 = vmul.f32 %v365, %v373
        %v378 = vmul.f32 %v366, %v373
        %v379 = vmul.f32 %v367, %v373
        %v380 = vmul.f32 %v368, %v373
        %v381 = vmul.f32 %v369, %v373
        %v382 = vmul.f32 %v370, %v373
        %v383 = vld [vmem:[%s2] sm:$0x1]
        %v385 = vperm.slane %v383, 0
        %v387 = vadd.f32 %v375, %v385
        %v388 = vadd.f32 %v376, %v385
        %v389 = vadd.f32 %v377, %v385
        %v390 = vadd.f32 %v378, %v385
        %v391 = vadd.f32 %v379, %v385
        %v392 = vadd.f32 %v380, %v385
        %v393 = vadd.f32 %v381, %v385
        %v394 = vadd.f32 %v382, %v385
        %v395 = vxor.u32 %v387, 2147483648
        %v396 = vxor.u32 %v388, 2147483648
        %v397 = vxor.u32 %v389, 2147483648
        %v398 = vxor.u32 %v390, 2147483648
        %v399 = vxor.u32 %v391, 2147483648
        %v400 = vxor.u32 %v392, 2147483648
        %v401 = vxor.u32 %v393, 2147483648
        %v402 = vxor.u32 %v394, 2147483648
        %v403 = vmul.f32 %v395, 1.442695
        %v404 = vpow.pop %v403
        %v405 = vmul.f32 %v396, 1.442695
        %v406 = vpow.pop %v405
        %v407 = vmul.f32 %v397, 1.442695
        %v408 = vpow.pop %v407
        %v409 = vmul.f32 %v398, 1.442695
        %v410 = vpow.pop %v409
        %v411 = vmul.f32 %v399, 1.442695
        %v412 = vpow.pop %v411
        %v413 = vmul.f32 %v400, 1.442695
        %v414 = vpow.pop %v413
        %v415 = vmul.f32 %v401, 1.442695
        %v416 = vpow.pop %v415
        %v417 = vmul.f32 %v402, 1.442695
        %v418 = vpow.pop %v417
        %v419 = vadd.f32 %v404, 1.0
        %v420 = vadd.f32 %v406, 1.0
        %v421 = vadd.f32 %v408, 1.0
        %v422 = vadd.f32 %v410, 1.0
        %v423 = vadd.f32 %v412, 1.0
        %v424 = vadd.f32 %v414, 1.0
        %v425 = vadd.f32 %v416, 1.0
        %v426 = vadd.f32 %v418, 1.0
        %v427 = vrcp.pop %v419
        %v428 = vmul.f32 %v419, %v427
        %v429 = vsub.f32 1.0, %v428
        %v430 = vmul.f32 %v427, %v429
        %v431 = vadd.f32 %v427, %v430
        %vm432 = vweird.f32 %v419
        %vm433 = vweird.f32 %v427
        %vm434 = vmor %vm432, %vm433
        %v435 = vsel %vm434, %v427, %v431
        %v436 = vand.u32 2147483647, %v419
        %vm437 = vcmp.eq.f32.partialorder %v436, 8.507059e+37
        %v438 = vand.u32 %v419, 2147483648
        %v439 = vor.u32 1.1754944e-38, %v438
        %v440 = vsel %vm437, %v439, %v435
        %v441 = vmul.f32 1.0, %v440
        %v442 = vrcp.pop %v420
        %v443 = vmul.f32 %v420, %v442
        %v444 = vsub.f32 1.0, %v443
        %v445 = vmul.f32 %v442, %v444
        %v446 = vadd.f32 %v442, %v445
        %vm447 = vweird.f32 %v420
        %vm448 = vweird.f32 %v442
        %vm449 = vmor %vm447, %vm448
        %v450 = vsel %vm449, %v442, %v446
        %v451 = vand.u32 2147483647, %v420
        %vm452 = vcmp.eq.f32.partialorder %v451, 8.507059e+37
        %v453 = vand.u32 %v420, 2147483648
        %v454 = vor.u32 1.1754944e-38, %v453
        %v455 = vsel %vm452, %v454, %v450
        %v456 = vmul.f32 1.0, %v455
        %v457 = vrcp.pop %v421
        %v458 = vmul.f32 %v421, %v457
        %v459 = vsub.f32 1.0, %v458
        %v460 = vmul.f32 %v457, %v459
        %v461 = vadd.f32 %v457, %v460
        %vm462 = vweird.f32 %v421
        %vm463 = vweird.f32 %v457
        %vm464 = vmor %vm462, %vm463
        %v465 = vsel %vm464, %v457, %v461
        %v466 = vand.u32 2147483647, %v421
        %vm467 = vcmp.eq.f32.partialorder %v466, 8.507059e+37
        %v468 = vand.u32 %v421, 2147483648
        %v469 = vor.u32 1.1754944e-38, %v468
        %v470 = vsel %vm467, %v469, %v465
        %v471 = vmul.f32 1.0, %v470
        %v472 = vrcp.pop %v422
        %v473 = vmul.f32 %v422, %v472
        %v474 = vsub.f32 1.0, %v473
        %v475 = vmul.f32 %v472, %v474
        %v476 = vadd.f32 %v472, %v475
        %vm477 = vweird.f32 %v422
        %vm478 = vweird.f32 %v472
        %vm479 = vmor %vm477, %vm478
        %v480 = vsel %vm479, %v472, %v476
        %v481 = vand.u32 2147483647, %v422
        %vm482 = vcmp.eq.f32.partialorder %v481, 8.507059e+37
        %v483 = vand.u32 %v422, 2147483648
        %v484 = vor.u32 1.1754944e-38, %v483
        %v485 = vsel %vm482, %v484, %v480
        %v486 = vmul.f32 1.0, %v485
        %v487 = vrcp.pop %v423
        %v488 = vmul.f32 %v423, %v487
        %v489 = vsub.f32 1.0, %v488
        %v490 = vmul.f32 %v487, %v489
        %v491 = vadd.f32 %v487, %v490
        %vm492 = vweird.f32 %v423
        %vm493 = vweird.f32 %v487
        %vm494 = vmor %vm492, %vm493
        %v495 = vsel %vm494, %v487, %v491
        %v496 = vand.u32 2147483647, %v423
        %vm497 = vcmp.eq.f32.partialorder %v496, 8.507059e+37
        %v498 = vand.u32 %v423, 2147483648
        %v499 = vor.u32 1.1754944e-38, %v498
        %v500 = vsel %vm497, %v499, %v495
        %v501 = vmul.f32 1.0, %v500
        %v502 = vrcp.pop %v424
        %v503 = vmul.f32 %v424, %v502
        %v504 = vsub.f32 1.0, %v503
        %v505 = vmul.f32 %v502, %v504
        %v506 = vadd.f32 %v502, %v505
        %vm507 = vweird.f32 %v424
        %vm508 = vweird.f32 %v502
        %vm509 = vmor %vm507, %vm508
        %v510 = vsel %vm509, %v502, %v506
        %v511 = vand.u32 2147483647, %v424
        %vm512 = vcmp.eq.f32.partialorder %v511, 8.507059e+37
        %v513 = vand.u32 %v424, 2147483648
        %v514 = vor.u32 1.1754944e-38, %v513
        %v515 = vsel %vm512, %v514, %v510
        %v516 = vmul.f32 1.0, %v515
        %v517 = vrcp.pop %v425
        %v518 = vmul.f32 %v425, %v517
        %v519 = vsub.f32 1.0, %v518
        %v520 = vmul.f32 %v517, %v519
        %v521 = vadd.f32 %v517, %v520
        %vm522 = vweird.f32 %v425
        %vm523 = vweird.f32 %v517
        %vm524 = vmor %vm522, %vm523
        %v525 = vsel %vm524, %v517, %v521
        %v526 = vand.u32 2147483647, %v425
        %vm527 = vcmp.eq.f32.partialorder %v526, 8.507059e+37
        %v528 = vand.u32 %v425, 2147483648
        %v529 = vor.u32 1.1754944e-38, %v528
        %v530 = vsel %vm527, %v529, %v525
        %v531 = vmul.f32 1.0, %v530
        %v532 = vrcp.pop %v426
        %v533 = vmul.f32 %v426, %v532
        %v534 = vsub.f32 1.0, %v533
        %v535 = vmul.f32 %v532, %v534
        %v536 = vadd.f32 %v532, %v535
        %vm537 = vweird.f32 %v426
        %vm538 = vweird.f32 %v532
        %vm539 = vmor %vm537, %vm538
        %v540 = vsel %vm539, %v532, %v536
        %v541 = vand.u32 2147483647, %v426
        %vm542 = vcmp.eq.f32.partialorder %v541, 8.507059e+37
        %v543 = vand.u32 %v426, 2147483648
        %v544 = vor.u32 1.1754944e-38, %v543
        %v545 = vsel %vm542, %v544, %v540
        %v546 = vmul.f32 1.0, %v545
        %v547 = vmul.f32 %v387, %v441
        %v548 = vmul.f32 %v388, %v456
        %v549 = vmul.f32 %v389, %v471
        %v550 = vmul.f32 %v390, %v486
        %v551 = vmul.f32 %v391, %v501
        %v552 = vmul.f32 %v392, %v516
        %v553 = vmul.f32 %v393, %v531
        %v554 = vmul.f32 %v394, %v546
        %v555 = vsel %vm282, %v547, 0.0
        %v556 = vsel %vm282, %v548, 0.0
        %v557 = vsel %vm282, %v549, 0.0
        %v558 = vsel %vm282, %v550, 0.0
        %v559 = vsel %vm282, %v551, 0.0
        %v560 = vsel %vm282, %v552, 0.0
        %v561 = vsel %vm282, %v553, 0.0
        %v562 = vsel %vm282, %v554, 0.0
        %v563 = vmul.f32 %v547, %v547
        %v564 = vmul.f32 %v548, %v548
        %v565 = vmul.f32 %v549, %v549
        %v566 = vmul.f32 %v550, %v550
        %v567 = vmul.f32 %v551, %v551
        %v568 = vmul.f32 %v552, %v552
        %v569 = vmul.f32 %v553, %v553
        %v570 = vmul.f32 %v554, %v554
        %v571 = vsel %vm282, %v563, 0.0
        %v572 = vsel %vm282, %v564, 0.0
        %v573 = vsel %vm282, %v565, 0.0
        %v574 = vsel %vm282, %v566, 0.0
        %v575 = vsel %vm282, %v567, 0.0
        %v576 = vsel %vm282, %v568, 0.0
        %v577 = vsel %vm282, %v569, 0.0
        %v578 = vsel %vm282, %v570, 0.0
        %579 = vadd.xlane.f32.xlu0 %v555
        %v580 = vpop.xlane.xlu0 %579
        %581 = vadd.xlane.f32.xlu0 %v556
        %v582 = vpop.xlane.xlu0 %581
        %583 = vadd.xlane.f32.xlu0 %v557
        %v584 = vpop.xlane.xlu0 %583
        %585 = vadd.xlane.f32.xlu0 %v558
        %v586 = vpop.xlane.xlu0 %585
        %587 = vadd.xlane.f32.xlu0 %v559
        %v588 = vpop.xlane.xlu0 %587
        %589 = vadd.xlane.f32.xlu0 %v560
        %v590 = vpop.xlane.xlu0 %589
        %591 = vadd.xlane.f32.xlu0 %v561
        %v592 = vpop.xlane.xlu0 %591
        %593 = vadd.xlane.f32.xlu0 %v562
        %v594 = vpop.xlane.xlu0 %593
        %v595 = vmul.f32 %v580, 0.015625
        %v596 = vmul.f32 %v582, 0.015625
        %v597 = vmul.f32 %v584, 0.015625
        %v598 = vmul.f32 %v586, 0.015625
        %v599 = vmul.f32 %v588, 0.015625
        %v600 = vmul.f32 %v590, 0.015625
        %v601 = vmul.f32 %v592, 0.015625
        %v602 = vmul.f32 %v594, 0.015625
        %603 = vadd.xlane.f32.xlu0 %v547
        %v604 = vpop.xlane.xlu0 %603
        %605 = vadd.xlane.f32.xlu0 %v548
        %v606 = vpop.xlane.xlu0 %605
        %607 = vadd.xlane.f32.xlu0 %v549
        %v608 = vpop.xlane.xlu0 %607
        %609 = vadd.xlane.f32.xlu0 %v550
        %v610 = vpop.xlane.xlu0 %609
        %611 = vadd.xlane.f32.xlu0 %v551
        %v612 = vpop.xlane.xlu0 %611
        %613 = vadd.xlane.f32.xlu0 %v552
        %v614 = vpop.xlane.xlu0 %613
        %615 = vadd.xlane.f32.xlu0 %v553
        %v616 = vpop.xlane.xlu0 %615
        %617 = vadd.xlane.f32.xlu0 %v554
        %v618 = vpop.xlane.xlu0 %617
        %v619 = vmul.f32 %v604, 0.015625
        %v620 = vmul.f32 %v606, 0.015625
        %v621 = vmul.f32 %v608, 0.015625
        %v622 = vmul.f32 %v610, 0.015625
        %v623 = vmul.f32 %v612, 0.015625
        %v624 = vmul.f32 %v614, 0.015625
        %v625 = vmul.f32 %v616, 0.015625
        %v626 = vmul.f32 %v618, 0.015625
        %v627 = vsub.f32 %v619, %v595
        %v628 = vsub.f32 %v620, %v596
        %v629 = vsub.f32 %v621, %v597
        %v630 = vsub.f32 %v622, %v598
        %v631 = vsub.f32 %v623, %v599
        %v632 = vsub.f32 %v624, %v600
        %v633 = vsub.f32 %v625, %v601
        %v634 = vsub.f32 %v626, %v602
        %635 = vadd.xlane.f32.xlu0 %v571
        %v636 = vpop.xlane.xlu0 %635
        %637 = vadd.xlane.f32.xlu0 %v572
        %v638 = vpop.xlane.xlu0 %637
        %639 = vadd.xlane.f32.xlu0 %v573
        %v640 = vpop.xlane.xlu0 %639
        %641 = vadd.xlane.f32.xlu0 %v574
        %v642 = vpop.xlane.xlu0 %641
        %643 = vadd.xlane.f32.xlu0 %v575
        %v644 = vpop.xlane.xlu0 %643
        %645 = vadd.xlane.f32.xlu0 %v576
        %v646 = vpop.xlane.xlu0 %645
        %647 = vadd.xlane.f32.xlu0 %v577
        %v648 = vpop.xlane.xlu0 %647
        %649 = vadd.xlane.f32.xlu0 %v578
        %v650 = vpop.xlane.xlu0 %649
        %v651 = vmul.f32 %v636, 0.015625
        %v652 = vmul.f32 %v638, 0.015625
        %v653 = vmul.f32 %v640, 0.015625
        %v654 = vmul.f32 %v642, 0.015625
        %v655 = vmul.f32 %v644, 0.015625
        %v656 = vmul.f32 %v646, 0.015625
        %v657 = vmul.f32 %v648, 0.015625
        %v658 = vmul.f32 %v650, 0.015625
        %659 = vadd.xlane.f32.xlu0 %v563
        %v660 = vpop.xlane.xlu0 %659
        %661 = vadd.xlane.f32.xlu0 %v564
        %v662 = vpop.xlane.xlu0 %661
        %663 = vadd.xlane.f32.xlu0 %v565
        %v664 = vpop.xlane.xlu0 %663
        %665 = vadd.xlane.f32.xlu0 %v566
        %v666 = vpop.xlane.xlu0 %665
        %667 = vadd.xlane.f32.xlu0 %v567
        %v668 = vpop.xlane.xlu0 %667
        %669 = vadd.xlane.f32.xlu0 %v568
        %v670 = vpop.xlane.xlu0 %669
        %671 = vadd.xlane.f32.xlu0 %v569
        %v672 = vpop.xlane.xlu0 %671
        %673 = vadd.xlane.f32.xlu0 %v570
        %v674 = vpop.xlane.xlu0 %673
        %v675 = vmul.f32 %v660, 0.015625
        %v676 = vmul.f32 %v662, 0.015625
        %v677 = vmul.f32 %v664, 0.015625
        %v678 = vmul.f32 %v666, 0.015625
        %v679 = vmul.f32 %v668, 0.015625
        %v680 = vmul.f32 %v670, 0.015625
        %v681 = vmul.f32 %v672, 0.015625
        %v682 = vmul.f32 %v674, 0.015625
        %v683 = vsub.f32 %v675, %v651
        %v684 = vsub.f32 %v676, %v652
        %v685 = vsub.f32 %v677, %v653
        %v686 = vsub.f32 %v678, %v654
        %v687 = vsub.f32 %v679, %v655
        %v688 = vsub.f32 %v680, %v656
        %v689 = vsub.f32 %v681, %v657
        %v690 = vsub.f32 %v682, %v658
        %v691 = vmul.f32 %v595, %v595
        %v692 = vmul.f32 %v596, %v596
        %v693 = vmul.f32 %v597, %v597
        %v694 = vmul.f32 %v598, %v598
        %v695 = vmul.f32 %v599, %v599
        %v696 = vmul.f32 %v600, %v600
        %v697 = vmul.f32 %v601, %v601
        %v698 = vmul.f32 %v602, %v602
        %v699 = vsub.f32 %v651, %v691
        %v700 = vsub.f32 %v652, %v692
        %v701 = vsub.f32 %v653, %v693
        %v702 = vsub.f32 %v654, %v694
        %v703 = vsub.f32 %v655, %v695
        %v704 = vsub.f32 %v656, %v696
        %v705 = vsub.f32 %v657, %v697
        %v706 = vsub.f32 %v658, %v698
        %v707 = vmax.f32 %v699, 0.0
        %v708 = vmax.f32 %v700, 0.0
        %v709 = vmax.f32 %v701, 0.0
        %v710 = vmax.f32 %v702, 0.0
        %v711 = vmax.f32 %v703, 0.0
        %v712 = vmax.f32 %v704, 0.0
        %v713 = vmax.f32 %v705, 0.0
        %v714 = vmax.f32 %v706, 0.0
        %v715 = vadd.f32 %v707, 1e-05
        %v716 = vadd.f32 %v708, 1e-05
        %v717 = vadd.f32 %v709, 1e-05
        %v718 = vadd.f32 %v710, 1e-05
        %v719 = vadd.f32 %v711, 1e-05
        %v720 = vadd.f32 %v712, 1e-05
        %v721 = vadd.f32 %v713, 1e-05
        %v722 = vadd.f32 %v714, 1e-05
        %v723 = vrsqrt.pop %v715
        %v724 = vmul.f32 %v723, %v715
        %v725 = vmul.f32 %v724, %v723
        %v726 = vmul.f32 0.5, %v725
        %v727 = vsub.f32 1.5, %v726
        %v728 = vmul.f32 %v723, %v727
        %vm729 = vweird.f32 %v715
        %vm730 = vweird.f32 %v723
        %vm731 = vmor %vm729, %vm730
        %v732 = vsel %vm731, %v723, %v728
        %v733 = vrsqrt.pop %v716
        %v734 = vmul.f32 %v733, %v716
        %v735 = vmul.f32 %v734, %v733
        %v736 = vmul.f32 0.5, %v735
        %v737 = vsub.f32 1.5, %v736
        %v738 = vmul.f32 %v733, %v737
        %vm739 = vweird.f32 %v716
        %vm740 = vweird.f32 %v733
        %vm741 = vmor %vm739, %vm740
        %v742 = vsel %vm741, %v733, %v738
        %v743 = vrsqrt.pop %v717
        %v744 = vmul.f32 %v743, %v717
        %v745 = vmul.f32 %v744, %v743
        %v746 = vmul.f32 0.5, %v745
        %v747 = vsub.f32 1.5, %v746
        %v748 = vmul.f32 %v743, %v747
        %vm749 = vweird.f32 %v717
        %vm750 = vweird.f32 %v743
        %vm751 = vmor %vm749, %vm750
        %v752 = vsel %vm751, %v743, %v748
        %v753 = vrsqrt.pop %v718
        %v754 = vmul.f32 %v753, %v718
        %v755 = vmul.f32 %v754, %v753
        %v756 = vmul.f32 0.5, %v755
        %v757 = vsub.f32 1.5, %v756
        %v758 = vmul.f32 %v753, %v757
        %vm759 = vweird.f32 %v718
        %vm760 = vweird.f32 %v753
        %vm761 = vmor %vm759, %vm760
        %v762 = vsel %vm761, %v753, %v758
        %v763 = vrsqrt.pop %v719
        %v764 = vmul.f32 %v763, %v719
        %v765 = vmul.f32 %v764, %v763
        %v766 = vmul.f32 0.5, %v765
        %v767 = vsub.f32 1.5, %v766
        %v768 = vmul.f32 %v763, %v767
        %vm769 = vweird.f32 %v719
        %vm770 = vweird.f32 %v763
        %vm771 = vmor %vm769, %vm770
        %v772 = vsel %vm771, %v763, %v768
        %v773 = vrsqrt.pop %v720
        %v774 = vmul.f32 %v773, %v720
        %v775 = vmul.f32 %v774, %v773
        %v776 = vmul.f32 0.5, %v775
        %v777 = vsub.f32 1.5, %v776
        %v778 = vmul.f32 %v773, %v777
        %vm779 = vweird.f32 %v720
        %vm780 = vweird.f32 %v773
        %vm781 = vmor %vm779, %vm780
        %v782 = vsel %vm781, %v773, %v778
        %v783 = vrsqrt.pop %v721
        %v784 = vmul.f32 %v783, %v721
        %v785 = vmul.f32 %v784, %v783
        %v786 = vmul.f32 0.5, %v785
        %v787 = vsub.f32 1.5, %v786
        %v788 = vmul.f32 %v783, %v787
        %vm789 = vweird.f32 %v721
        %vm790 = vweird.f32 %v783
        %vm791 = vmor %vm789, %vm790
        %v792 = vsel %vm791, %v783, %v788
        %v793 = vrsqrt.pop %v722
        %v794 = vmul.f32 %v793, %v722
        %v795 = vmul.f32 %v794, %v793
        %v796 = vmul.f32 0.5, %v795
        %v797 = vsub.f32 1.5, %v796
        %v798 = vmul.f32 %v793, %v797
        %vm799 = vweird.f32 %v722
        %vm800 = vweird.f32 %v793
        %vm801 = vmor %vm799, %vm800
        %v802 = vsel %vm801, %v793, %v798
        %v803 = vmul.f32 %v627, %v627
        %v804 = vmul.f32 %v628, %v628
        %v805 = vmul.f32 %v629, %v629
        %v806 = vmul.f32 %v630, %v630
        %v807 = vmul.f32 %v631, %v631
        %v808 = vmul.f32 %v632, %v632
        %v809 = vmul.f32 %v633, %v633
        %v810 = vmul.f32 %v634, %v634
        %v811 = vsub.f32 %v683, %v803
        %v812 = vsub.f32 %v684, %v804
        %v813 = vsub.f32 %v685, %v805
        %v814 = vsub.f32 %v686, %v806
        %v815 = vsub.f32 %v687, %v807
        %v816 = vsub.f32 %v688, %v808
        %v817 = vsub.f32 %v689, %v809
        %v818 = vsub.f32 %v690, %v810
        %v819 = vmax.f32 %v811, 0.0
        %v820 = vmax.f32 %v812, 0.0
        %v821 = vmax.f32 %v813, 0.0
        %v822 = vmax.f32 %v814, 0.0
        %v823 = vmax.f32 %v815, 0.0
        %v824 = vmax.f32 %v816, 0.0
        %v825 = vmax.f32 %v817, 0.0
        %v826 = vmax.f32 %v818, 0.0
        %v827 = vadd.f32 %v819, 1e-05
        %v828 = vadd.f32 %v820, 1e-05
        %v829 = vadd.f32 %v821, 1e-05
        %v830 = vadd.f32 %v822, 1e-05
        %v831 = vadd.f32 %v823, 1e-05
        %v832 = vadd.f32 %v824, 1e-05
        %v833 = vadd.f32 %v825, 1e-05
        %v834 = vadd.f32 %v826, 1e-05
        %v835 = vrsqrt.pop %v827
        %v836 = vmul.f32 %v835, %v827
        %v837 = vmul.f32 %v836, %v835
        %v838 = vmul.f32 0.5, %v837
        %v839 = vsub.f32 1.5, %v838
        %v840 = vmul.f32 %v835, %v839
        %vm841 = vweird.f32 %v827
        %vm842 = vweird.f32 %v835
        %vm843 = vmor %vm841, %vm842
        %v844 = vsel %vm843, %v835, %v840
        %v845 = vrsqrt.pop %v828
        %v846 = vmul.f32 %v845, %v828
        %v847 = vmul.f32 %v846, %v845
        %v848 = vmul.f32 0.5, %v847
        %v849 = vsub.f32 1.5, %v848
        %v850 = vmul.f32 %v845, %v849
        %vm851 = vweird.f32 %v828
        %vm852 = vweird.f32 %v845
        %vm853 = vmor %vm851, %vm852
        %v854 = vsel %vm853, %v845, %v850
        %v855 = vrsqrt.pop %v829
        %v856 = vmul.f32 %v855, %v829
        %v857 = vmul.f32 %v856, %v855
        %v858 = vmul.f32 0.5, %v857
        %v859 = vsub.f32 1.5, %v858
        %v860 = vmul.f32 %v855, %v859
        %vm861 = vweird.f32 %v829
        %vm862 = vweird.f32 %v855
        %vm863 = vmor %vm861, %vm862
        %v864 = vsel %vm863, %v855, %v860
        %v865 = vrsqrt.pop %v830
        %v866 = vmul.f32 %v865, %v830
        %v867 = vmul.f32 %v866, %v865
        %v868 = vmul.f32 0.5, %v867
        %v869 = vsub.f32 1.5, %v868
        %v870 = vmul.f32 %v865, %v869
        %vm871 = vweird.f32 %v830
        %vm872 = vweird.f32 %v865
        %vm873 = vmor %vm871, %vm872
        %v874 = vsel %vm873, %v865, %v870
        %v875 = vrsqrt.pop %v831
        %v876 = vmul.f32 %v875, %v831
        %v877 = vmul.f32 %v876, %v875
        %v878 = vmul.f32 0.5, %v877
        %v879 = vsub.f32 1.5, %v878
        %v880 = vmul.f32 %v875, %v879
        %vm881 = vweird.f32 %v831
        %vm882 = vweird.f32 %v875
        %vm883 = vmor %vm881, %vm882
        %v884 = vsel %vm883, %v875, %v880
        %v885 = vrsqrt.pop %v832
        %v886 = vmul.f32 %v885, %v832
        %v887 = vmul.f32 %v886, %v885
        %v888 = vmul.f32 0.5, %v887
        %v889 = vsub.f32 1.5, %v888
        %v890 = vmul.f32 %v885, %v889
        %vm891 = vweird.f32 %v832
        %vm892 = vweird.f32 %v885
        %vm893 = vmor %vm891, %vm892
        %v894 = vsel %vm893, %v885, %v890
        %v895 = vrsqrt.pop %v833
        %v896 = vmul.f32 %v895, %v833
        %v897 = vmul.f32 %v896, %v895
        %v898 = vmul.f32 0.5, %v897
        %v899 = vsub.f32 1.5, %v898
        %v900 = vmul.f32 %v895, %v899
        %vm901 = vweird.f32 %v833
        %vm902 = vweird.f32 %v895
        %vm903 = vmor %vm901, %vm902
        %v904 = vsel %vm903, %v895, %v900
        %v905 = vrsqrt.pop %v834
        %v906 = vmul.f32 %v905, %v834
        %v907 = vmul.f32 %v906, %v905
        %v908 = vmul.f32 0.5, %v907
        %v909 = vsub.f32 1.5, %v908
        %v910 = vmul.f32 %v905, %v909
        %vm911 = vweird.f32 %v834
        %vm912 = vweird.f32 %v905
        %vm913 = vmor %vm911, %vm912
        %v914 = vsel %vm913, %v905, %v910
        %v915 = vsel %vm282, %v595, %v627
        %v916 = vsel %vm282, %v596, %v628
        %v917 = vsel %vm282, %v597, %v629
        %v918 = vsel %vm282, %v598, %v630
        %v919 = vsel %vm282, %v599, %v631
        %v920 = vsel %vm282, %v600, %v632
        %v921 = vsel %vm282, %v601, %v633
        %v922 = vsel %vm282, %v602, %v634
        %v923 = vsel %vm282, %v732, %v844
        %v924 = vsel %vm282, %v742, %v854
        %v925 = vsel %vm282, %v752, %v864
        %v926 = vsel %vm282, %v762, %v874
        %v927 = vsel %vm282, %v772, %v884
        %v928 = vsel %vm282, %v782, %v894
        %v929 = vsel %vm282, %v792, %v904
        %v930 = vsel %vm282, %v802, %v914
        %v931 = vsub.f32 %v547, %v915
        %v932 = vsub.f32 %v548, %v916
        %v933 = vsub.f32 %v549, %v917
        %v934 = vsub.f32 %v550, %v918
        %v935 = vsub.f32 %v551, %v919
        %v936 = vsub.f32 %v552, %v920
        %v937 = vsub.f32 %v553, %v921
        %v938 = vsub.f32 %v554, %v922
        %v939 = vmul.f32 %v931, %v923
        %v940 = vmul.f32 %v932, %v924
        %v941 = vmul.f32 %v933, %v925
        %v942 = vmul.f32 %v934, %v926
        %v943 = vmul.f32 %v935, %v927
        %v944 = vmul.f32 %v936, %v928
        %v945 = vmul.f32 %v937, %v929
        %v946 = vmul.f32 %v938, %v930
        %v947 = vpack.c.bf16 %v940, %v939
        %v948 = vpack.c.bf16 %v942, %v941
        %v949 = vpack.c.bf16 %v944, %v943
        %v950 = vpack.c.bf16 %v946, %v945
        %v951 = vld [vmem:[%s3] sm:$0xf]
        %v952 = vld [vmem:[%s3 + $0x4] sm:$0xf]
        %v953 = vld [vmem:[%s3 + $0x8] sm:$0xf]
        %v954 = vld [vmem:[%s3 + $0xc] sm:$0xf]
        %v955 = vld [vmem:[%s3 + $0x10] sm:$0xf]
        %v956 = vld [vmem:[%s3 + $0x14] sm:$0xf]
        %v957 = vld [vmem:[%s3 + $0x18] sm:$0xf]
        %v958 = vld [vmem:[%s3 + $0x1c] sm:$0xf]
        %v959 = vld [vmem:[%s3 + $0x20] sm:$0xf]
        %v960 = vld [vmem:[%s3 + $0x24] sm:$0xf]
        %v961 = vld [vmem:[%s3 + $0x28] sm:$0xf]
        %v962 = vld [vmem:[%s3 + $0x2c] sm:$0xf]
        %v963 = vld [vmem:[%s3 + $0x30] sm:$0xf]
        %v964 = vld [vmem:[%s3 + $0x34] sm:$0xf]
        %v965 = vld [vmem:[%s3 + $0x38] sm:$0xf]
        %v966 = vld [vmem:[%s3 + $0x3c] sm:$0xf]
        %v967 = vld [vmem:[%s4] sm:$0x1]
        %v969 = vperm.slane %v967, 0
        %v987 = vunpack.c.l.b16 %v951
        %v988 = vunpack.c.l.b16 %v952
        %v989 = vunpack.c.l.b16 %v953
        %v990 = vunpack.c.l.b16 %v954
        %v991 = vunpack.c.l.b16 %v955
        %v992 = vunpack.c.l.b16 %v956
        %v993 = vunpack.c.l.b16 %v957
        %v994 = vunpack.c.l.b16 %v958
        %v995 = vunpack.c.l.b16 %v959
        %v996 = vunpack.c.l.b16 %v960
        %v997 = vunpack.c.l.b16 %v961
        %v998 = vunpack.c.l.b16 %v962
        %v999 = vunpack.c.l.b16 %v963
        %v1000 = vunpack.c.l.b16 %v964
        %v1001 = vunpack.c.l.b16 %v965
        %v1002 = vunpack.c.l.b16 %v966
        %v1003 = vpack.c.b16 %v988, %v987
        %v1004 = vpack.c.b16 %v990, %v989
        %v1005 = vpack.c.b16 %v992, %v991
        %v1006 = vpack.c.b16 %v994, %v993
        %v1007 = vpack.c.b16 %v996, %v995
        %v1008 = vpack.c.b16 %v998, %v997
        %v1009 = vpack.c.b16 %v1000, %v999
        %v1010 = vpack.c.b16 %v1002, %v1001
        %1019 = vmatpush.bf16.msra.mxu0 %v1010
        %1020 = vmatpush.bf16.msra.mxu0 %v1009
        %1021 = vmatpush.bf16.msra.mxu0 %v1008
        %1022 = vmatpush.bf16.msra.mxu0 %v1007
        %1023 = vmatpush.bf16.msra.mxu0 %v1006
        %1024 = vmatpush.bf16.msra.mxu0 %v1005
        %1025 = vmatpush.bf16.msra.mxu0 %v1004
        %1026 = vmatpush.bf16.msra.mxu0 %v1003
        %1027 = vmatmul.bf16.gmra.mxu0 %v947
        %v1028 = vpop.f32.mrf.mxu0
        %v1029 = vadd.f32 %v969, %v1028
        %v1030 = vpop.f32.mrf.mxu0
        %v1031 = vadd.f32 %v969, %v1030
        %1032 = vmatmul.bf16.gmra.mxu0 %v948
        %v1033 = vpop.f32.mrf.mxu0
        %v1034 = vadd.f32 %v969, %v1033
        %v1035 = vpop.f32.mrf.mxu0
        %v1036 = vadd.f32 %v969, %v1035
        %1037 = vmatmul.bf16.gmra.mxu0 %v949
        %v1038 = vpop.f32.mrf.mxu0
        %v1039 = vadd.f32 %v969, %v1038
        %v1040 = vpop.f32.mrf.mxu0
        %v1041 = vadd.f32 %v969, %v1040
        %1042 = vmatmul.bf16.gmra.mxu0 %v950
        %v1043 = vpop.f32.mrf.mxu0
        %v1044 = vadd.f32 %v969, %v1043
        %v1045 = vpop.f32.mrf.mxu0
        %v1046 = vadd.f32 %v969, %v1045
        %1047 = vdwg.mxu0
        %v1048 = vxor.u32 %v1029, 2147483648
        %v1049 = vxor.u32 %v1031, 2147483648
        %v1050 = vxor.u32 %v1034, 2147483648
        %v1051 = vxor.u32 %v1036, 2147483648
        %v1052 = vxor.u32 %v1039, 2147483648
        %v1053 = vxor.u32 %v1041, 2147483648
        %v1054 = vxor.u32 %v1044, 2147483648
        %v1055 = vxor.u32 %v1046, 2147483648
        %v1056 = vmul.f32 %v1048, 1.442695
        %v1057 = vpow.pop %v1056
        %v1058 = vmul.f32 %v1049, 1.442695
        %v1059 = vpow.pop %v1058
        %v1060 = vmul.f32 %v1050, 1.442695
        %v1061 = vpow.pop %v1060
        %v1062 = vmul.f32 %v1051, 1.442695
        %v1063 = vpow.pop %v1062
        %v1064 = vmul.f32 %v1052, 1.442695
        %v1065 = vpow.pop %v1064
        %v1066 = vmul.f32 %v1053, 1.442695
        %v1067 = vpow.pop %v1066
        %v1068 = vmul.f32 %v1054, 1.442695
        %v1069 = vpow.pop %v1068
        %v1070 = vmul.f32 %v1055, 1.442695
        %v1071 = vpow.pop %v1070
        %v1072 = vadd.f32 %v1057, 1.0
        %v1073 = vadd.f32 %v1059, 1.0
        %v1074 = vadd.f32 %v1061, 1.0
        %v1075 = vadd.f32 %v1063, 1.0
        %v1076 = vadd.f32 %v1065, 1.0
        %v1077 = vadd.f32 %v1067, 1.0
        %v1078 = vadd.f32 %v1069, 1.0
        %v1079 = vadd.f32 %v1071, 1.0
        %v1080 = vrcp.pop %v1072
        %v1081 = vmul.f32 %v1072, %v1080
        %v1082 = vsub.f32 1.0, %v1081
        %v1083 = vmul.f32 %v1080, %v1082
        %v1084 = vadd.f32 %v1080, %v1083
        %vm1085 = vweird.f32 %v1072
        %vm1086 = vweird.f32 %v1080
        %vm1087 = vmor %vm1085, %vm1086
        %v1088 = vsel %vm1087, %v1080, %v1084
        %v1089 = vand.u32 2147483647, %v1072
        %vm1090 = vcmp.eq.f32.partialorder %v1089, 8.507059e+37
        %v1091 = vand.u32 %v1072, 2147483648
        %v1092 = vor.u32 1.1754944e-38, %v1091
        %v1093 = vsel %vm1090, %v1092, %v1088
        %v1094 = vmul.f32 1.0, %v1093
        %v1095 = vrcp.pop %v1073
        %v1096 = vmul.f32 %v1073, %v1095
        %v1097 = vsub.f32 1.0, %v1096
        %v1098 = vmul.f32 %v1095, %v1097
        %v1099 = vadd.f32 %v1095, %v1098
        %vm1100 = vweird.f32 %v1073
        %vm1101 = vweird.f32 %v1095
        %vm1102 = vmor %vm1100, %vm1101
        %v1103 = vsel %vm1102, %v1095, %v1099
        %v1104 = vand.u32 2147483647, %v1073
        %vm1105 = vcmp.eq.f32.partialorder %v1104, 8.507059e+37
        %v1106 = vand.u32 %v1073, 2147483648
        %v1107 = vor.u32 1.1754944e-38, %v1106
        %v1108 = vsel %vm1105, %v1107, %v1103
        %v1109 = vmul.f32 1.0, %v1108
        %v1110 = vrcp.pop %v1074
        %v1111 = vmul.f32 %v1074, %v1110
        %v1112 = vsub.f32 1.0, %v1111
        %v1113 = vmul.f32 %v1110, %v1112
        %v1114 = vadd.f32 %v1110, %v1113
        %vm1115 = vweird.f32 %v1074
        %vm1116 = vweird.f32 %v1110
        %vm1117 = vmor %vm1115, %vm1116
        %v1118 = vsel %vm1117, %v1110, %v1114
        %v1119 = vand.u32 2147483647, %v1074
        %vm1120 = vcmp.eq.f32.partialorder %v1119, 8.507059e+37
        %v1121 = vand.u32 %v1074, 2147483648
        %v1122 = vor.u32 1.1754944e-38, %v1121
        %v1123 = vsel %vm1120, %v1122, %v1118
        %v1124 = vmul.f32 1.0, %v1123
        %v1125 = vrcp.pop %v1075
        %v1126 = vmul.f32 %v1075, %v1125
        %v1127 = vsub.f32 1.0, %v1126
        %v1128 = vmul.f32 %v1125, %v1127
        %v1129 = vadd.f32 %v1125, %v1128
        %vm1130 = vweird.f32 %v1075
        %vm1131 = vweird.f32 %v1125
        %vm1132 = vmor %vm1130, %vm1131
        %v1133 = vsel %vm1132, %v1125, %v1129
        %v1134 = vand.u32 2147483647, %v1075
        %vm1135 = vcmp.eq.f32.partialorder %v1134, 8.507059e+37
        %v1136 = vand.u32 %v1075, 2147483648
        %v1137 = vor.u32 1.1754944e-38, %v1136
        %v1138 = vsel %vm1135, %v1137, %v1133
        %v1139 = vmul.f32 1.0, %v1138
        %v1140 = vrcp.pop %v1076
        %v1141 = vmul.f32 %v1076, %v1140
        %v1142 = vsub.f32 1.0, %v1141
        %v1143 = vmul.f32 %v1140, %v1142
        %v1144 = vadd.f32 %v1140, %v1143
        %vm1145 = vweird.f32 %v1076
        %vm1146 = vweird.f32 %v1140
        %vm1147 = vmor %vm1145, %vm1146
        %v1148 = vsel %vm1147, %v1140, %v1144
        %v1149 = vand.u32 2147483647, %v1076
        %vm1150 = vcmp.eq.f32.partialorder %v1149, 8.507059e+37
        %v1151 = vand.u32 %v1076, 2147483648
        %v1152 = vor.u32 1.1754944e-38, %v1151
        %v1153 = vsel %vm1150, %v1152, %v1148
        %v1154 = vmul.f32 1.0, %v1153
        %v1155 = vrcp.pop %v1077
        %v1156 = vmul.f32 %v1077, %v1155
        %v1157 = vsub.f32 1.0, %v1156
        %v1158 = vmul.f32 %v1155, %v1157
        %v1159 = vadd.f32 %v1155, %v1158
        %vm1160 = vweird.f32 %v1077
        %vm1161 = vweird.f32 %v1155
        %vm1162 = vmor %vm1160, %vm1161
        %v1163 = vsel %vm1162, %v1155, %v1159
        %v1164 = vand.u32 2147483647, %v1077
        %vm1165 = vcmp.eq.f32.partialorder %v1164, 8.507059e+37
        %v1166 = vand.u32 %v1077, 2147483648
        %v1167 = vor.u32 1.1754944e-38, %v1166
        %v1168 = vsel %vm1165, %v1167, %v1163
        %v1169 = vmul.f32 1.0, %v1168
        %v1170 = vrcp.pop %v1078
        %v1171 = vmul.f32 %v1078, %v1170
        %v1172 = vsub.f32 1.0, %v1171
        %v1173 = vmul.f32 %v1170, %v1172
        %v1174 = vadd.f32 %v1170, %v1173
        %vm1175 = vweird.f32 %v1078
        %vm1176 = vweird.f32 %v1170
        %vm1177 = vmor %vm1175, %vm1176
        %v1178 = vsel %vm1177, %v1170, %v1174
        %v1179 = vand.u32 2147483647, %v1078
        %vm1180 = vcmp.eq.f32.partialorder %v1179, 8.507059e+37
        %v1181 = vand.u32 %v1078, 2147483648
        %v1182 = vor.u32 1.1754944e-38, %v1181
        %v1183 = vsel %vm1180, %v1182, %v1178
        %v1184 = vmul.f32 1.0, %v1183
        %v1185 = vrcp.pop %v1079
        %v1186 = vmul.f32 %v1079, %v1185
        %v1187 = vsub.f32 1.0, %v1186
        %v1188 = vmul.f32 %v1185, %v1187
        %v1189 = vadd.f32 %v1185, %v1188
        %vm1190 = vweird.f32 %v1079
        %vm1191 = vweird.f32 %v1185
        %vm1192 = vmor %vm1190, %vm1191
        %v1193 = vsel %vm1192, %v1185, %v1189
        %v1194 = vand.u32 2147483647, %v1079
        %vm1195 = vcmp.eq.f32.partialorder %v1194, 8.507059e+37
        %v1196 = vand.u32 %v1079, 2147483648
        %v1197 = vor.u32 1.1754944e-38, %v1196
        %v1198 = vsel %vm1195, %v1197, %v1193
        %v1199 = vmul.f32 1.0, %v1198
        %v1200 = vmul.f32 %v1029, %v1094
        %v1201 = vmul.f32 %v1031, %v1109
        %v1202 = vmul.f32 %v1034, %v1124
        %v1203 = vmul.f32 %v1036, %v1139
        %v1204 = vmul.f32 %v1039, %v1154
        %v1205 = vmul.f32 %v1041, %v1169
        %v1206 = vmul.f32 %v1044, %v1184
        %v1207 = vmul.f32 %v1046, %v1199
        %v1208 = vsel %vm282, %v1200, 0.0
        %v1209 = vsel %vm282, %v1201, 0.0
        %v1210 = vsel %vm282, %v1202, 0.0
        %v1211 = vsel %vm282, %v1203, 0.0
        %v1212 = vsel %vm282, %v1204, 0.0
        %v1213 = vsel %vm282, %v1205, 0.0
        %v1214 = vsel %vm282, %v1206, 0.0
        %v1215 = vsel %vm282, %v1207, 0.0
        %v1216 = vmul.f32 %v1200, %v1200
        %v1217 = vmul.f32 %v1201, %v1201
        %v1218 = vmul.f32 %v1202, %v1202
        %v1219 = vmul.f32 %v1203, %v1203
        %v1220 = vmul.f32 %v1204, %v1204
        %v1221 = vmul.f32 %v1205, %v1205
        %v1222 = vmul.f32 %v1206, %v1206
        %v1223 = vmul.f32 %v1207, %v1207
        %v1224 = vsel %vm282, %v1216, 0.0
        %v1225 = vsel %vm282, %v1217, 0.0
        %v1226 = vsel %vm282, %v1218, 0.0
        %v1227 = vsel %vm282, %v1219, 0.0
        %v1228 = vsel %vm282, %v1220, 0.0
        %v1229 = vsel %vm282, %v1221, 0.0
        %v1230 = vsel %vm282, %v1222, 0.0
        %v1231 = vsel %vm282, %v1223, 0.0
        %1232 = vadd.xlane.f32.xlu0 %v1208
        %v1233 = vpop.xlane.xlu0 %1232
        %1234 = vadd.xlane.f32.xlu0 %v1209
        %v1235 = vpop.xlane.xlu0 %1234
        %1236 = vadd.xlane.f32.xlu0 %v1210
        %v1237 = vpop.xlane.xlu0 %1236
        %1238 = vadd.xlane.f32.xlu0 %v1211
        %v1239 = vpop.xlane.xlu0 %1238
        %1240 = vadd.xlane.f32.xlu0 %v1212
        %v1241 = vpop.xlane.xlu0 %1240
        %1242 = vadd.xlane.f32.xlu0 %v1213
        %v1243 = vpop.xlane.xlu0 %1242
        %1244 = vadd.xlane.f32.xlu0 %v1214
        %v1245 = vpop.xlane.xlu0 %1244
        %1246 = vadd.xlane.f32.xlu0 %v1215
        %v1247 = vpop.xlane.xlu0 %1246
        %v1248 = vmul.f32 %v1233, 0.015625
        %v1249 = vmul.f32 %v1235, 0.015625
        %v1250 = vmul.f32 %v1237, 0.015625
        %v1251 = vmul.f32 %v1239, 0.015625
        %v1252 = vmul.f32 %v1241, 0.015625
        %v1253 = vmul.f32 %v1243, 0.015625
        %v1254 = vmul.f32 %v1245, 0.015625
        %v1255 = vmul.f32 %v1247, 0.015625
        %1256 = vadd.xlane.f32.xlu0 %v1200
        %v1257 = vpop.xlane.xlu0 %1256
        %1258 = vadd.xlane.f32.xlu0 %v1201
        %v1259 = vpop.xlane.xlu0 %1258
        %1260 = vadd.xlane.f32.xlu0 %v1202
        %v1261 = vpop.xlane.xlu0 %1260
        %1262 = vadd.xlane.f32.xlu0 %v1203
        %v1263 = vpop.xlane.xlu0 %1262
        %1264 = vadd.xlane.f32.xlu0 %v1204
        %v1265 = vpop.xlane.xlu0 %1264
        %1266 = vadd.xlane.f32.xlu0 %v1205
        %v1267 = vpop.xlane.xlu0 %1266
        %1268 = vadd.xlane.f32.xlu0 %v1206
        %v1269 = vpop.xlane.xlu0 %1268
        %1270 = vadd.xlane.f32.xlu0 %v1207
        %v1271 = vpop.xlane.xlu0 %1270
        %v1272 = vmul.f32 %v1257, 0.015625
        %v1273 = vmul.f32 %v1259, 0.015625
        %v1274 = vmul.f32 %v1261, 0.015625
        %v1275 = vmul.f32 %v1263, 0.015625
        %v1276 = vmul.f32 %v1265, 0.015625
        %v1277 = vmul.f32 %v1267, 0.015625
        %v1278 = vmul.f32 %v1269, 0.015625
        %v1279 = vmul.f32 %v1271, 0.015625
        %v1280 = vsub.f32 %v1272, %v1248
        %v1281 = vsub.f32 %v1273, %v1249
        %v1282 = vsub.f32 %v1274, %v1250
        %v1283 = vsub.f32 %v1275, %v1251
        %v1284 = vsub.f32 %v1276, %v1252
        %v1285 = vsub.f32 %v1277, %v1253
        %v1286 = vsub.f32 %v1278, %v1254
        %v1287 = vsub.f32 %v1279, %v1255
        %1288 = vadd.xlane.f32.xlu0 %v1224
        %v1289 = vpop.xlane.xlu0 %1288
        %1290 = vadd.xlane.f32.xlu0 %v1225
        %v1291 = vpop.xlane.xlu0 %1290
        %1292 = vadd.xlane.f32.xlu0 %v1226
        %v1293 = vpop.xlane.xlu0 %1292
        %1294 = vadd.xlane.f32.xlu0 %v1227
        %v1295 = vpop.xlane.xlu0 %1294
        %1296 = vadd.xlane.f32.xlu0 %v1228
        %v1297 = vpop.xlane.xlu0 %1296
        %1298 = vadd.xlane.f32.xlu0 %v1229
        %v1299 = vpop.xlane.xlu0 %1298
        %1300 = vadd.xlane.f32.xlu0 %v1230
        %v1301 = vpop.xlane.xlu0 %1300
        %1302 = vadd.xlane.f32.xlu0 %v1231
        %v1303 = vpop.xlane.xlu0 %1302
        %v1304 = vmul.f32 %v1289, 0.015625
        %v1305 = vmul.f32 %v1291, 0.015625
        %v1306 = vmul.f32 %v1293, 0.015625
        %v1307 = vmul.f32 %v1295, 0.015625
        %v1308 = vmul.f32 %v1297, 0.015625
        %v1309 = vmul.f32 %v1299, 0.015625
        %v1310 = vmul.f32 %v1301, 0.015625
        %v1311 = vmul.f32 %v1303, 0.015625
        %1312 = vadd.xlane.f32.xlu0 %v1216
        %v1313 = vpop.xlane.xlu0 %1312
        %1314 = vadd.xlane.f32.xlu0 %v1217
        %v1315 = vpop.xlane.xlu0 %1314
        %1316 = vadd.xlane.f32.xlu0 %v1218
        %v1317 = vpop.xlane.xlu0 %1316
        %1318 = vadd.xlane.f32.xlu0 %v1219
        %v1319 = vpop.xlane.xlu0 %1318
        %1320 = vadd.xlane.f32.xlu0 %v1220
        %v1321 = vpop.xlane.xlu0 %1320
        %1322 = vadd.xlane.f32.xlu0 %v1221
        %v1323 = vpop.xlane.xlu0 %1322
        %1324 = vadd.xlane.f32.xlu0 %v1222
        %v1325 = vpop.xlane.xlu0 %1324
        %1326 = vadd.xlane.f32.xlu0 %v1223
        %v1327 = vpop.xlane.xlu0 %1326
        %v1328 = vmul.f32 %v1313, 0.015625
        %v1329 = vmul.f32 %v1315, 0.015625
        %v1330 = vmul.f32 %v1317, 0.015625
        %v1331 = vmul.f32 %v1319, 0.015625
        %v1332 = vmul.f32 %v1321, 0.015625
        %v1333 = vmul.f32 %v1323, 0.015625
        %v1334 = vmul.f32 %v1325, 0.015625
        %v1335 = vmul.f32 %v1327, 0.015625
        %v1336 = vsub.f32 %v1328, %v1304
        %v1337 = vsub.f32 %v1329, %v1305
        %v1338 = vsub.f32 %v1330, %v1306
        %v1339 = vsub.f32 %v1331, %v1307
        %v1340 = vsub.f32 %v1332, %v1308
        %v1341 = vsub.f32 %v1333, %v1309
        %v1342 = vsub.f32 %v1334, %v1310
        %v1343 = vsub.f32 %v1335, %v1311
        %v1344 = vmul.f32 %v1248, %v1248
        %v1345 = vmul.f32 %v1249, %v1249
        %v1346 = vmul.f32 %v1250, %v1250
        %v1347 = vmul.f32 %v1251, %v1251
        %v1348 = vmul.f32 %v1252, %v1252
        %v1349 = vmul.f32 %v1253, %v1253
        %v1350 = vmul.f32 %v1254, %v1254
        %v1351 = vmul.f32 %v1255, %v1255
        %v1352 = vsub.f32 %v1304, %v1344
        %v1353 = vsub.f32 %v1305, %v1345
        %v1354 = vsub.f32 %v1306, %v1346
        %v1355 = vsub.f32 %v1307, %v1347
        %v1356 = vsub.f32 %v1308, %v1348
        %v1357 = vsub.f32 %v1309, %v1349
        %v1358 = vsub.f32 %v1310, %v1350
        %v1359 = vsub.f32 %v1311, %v1351
        %v1360 = vmax.f32 %v1352, 0.0
        %v1361 = vmax.f32 %v1353, 0.0
        %v1362 = vmax.f32 %v1354, 0.0
        %v1363 = vmax.f32 %v1355, 0.0
        %v1364 = vmax.f32 %v1356, 0.0
        %v1365 = vmax.f32 %v1357, 0.0
        %v1366 = vmax.f32 %v1358, 0.0
        %v1367 = vmax.f32 %v1359, 0.0
        %v1368 = vadd.f32 %v1360, 1e-05
        %v1369 = vadd.f32 %v1361, 1e-05
        %v1370 = vadd.f32 %v1362, 1e-05
        %v1371 = vadd.f32 %v1363, 1e-05
        %v1372 = vadd.f32 %v1364, 1e-05
        %v1373 = vadd.f32 %v1365, 1e-05
        %v1374 = vadd.f32 %v1366, 1e-05
        %v1375 = vadd.f32 %v1367, 1e-05
        %v1376 = vrsqrt.pop %v1368
        %v1377 = vmul.f32 %v1376, %v1368
        %v1378 = vmul.f32 %v1377, %v1376
        %v1379 = vmul.f32 0.5, %v1378
        %v1380 = vsub.f32 1.5, %v1379
        %v1381 = vmul.f32 %v1376, %v1380
        %vm1382 = vweird.f32 %v1368
        %vm1383 = vweird.f32 %v1376
        %vm1384 = vmor %vm1382, %vm1383
        %v1385 = vsel %vm1384, %v1376, %v1381
        %v1386 = vrsqrt.pop %v1369
        %v1387 = vmul.f32 %v1386, %v1369
        %v1388 = vmul.f32 %v1387, %v1386
        %v1389 = vmul.f32 0.5, %v1388
        %v1390 = vsub.f32 1.5, %v1389
        %v1391 = vmul.f32 %v1386, %v1390
        %vm1392 = vweird.f32 %v1369
        %vm1393 = vweird.f32 %v1386
        %vm1394 = vmor %vm1392, %vm1393
        %v1395 = vsel %vm1394, %v1386, %v1391
        %v1396 = vrsqrt.pop %v1370
        %v1397 = vmul.f32 %v1396, %v1370
        %v1398 = vmul.f32 %v1397, %v1396
        %v1399 = vmul.f32 0.5, %v1398
        %v1400 = vsub.f32 1.5, %v1399
        %v1401 = vmul.f32 %v1396, %v1400
        %vm1402 = vweird.f32 %v1370
        %vm1403 = vweird.f32 %v1396
        %vm1404 = vmor %vm1402, %vm1403
        %v1405 = vsel %vm1404, %v1396, %v1401
        %v1406 = vrsqrt.pop %v1371
        %v1407 = vmul.f32 %v1406, %v1371
        %v1408 = vmul.f32 %v1407, %v1406
        %v1409 = vmul.f32 0.5, %v1408
        %v1410 = vsub.f32 1.5, %v1409
        %v1411 = vmul.f32 %v1406, %v1410
        %vm1412 = vweird.f32 %v1371
        %vm1413 = vweird.f32 %v1406
        %vm1414 = vmor %vm1412, %vm1413
        %v1415 = vsel %vm1414, %v1406, %v1411
        %v1416 = vrsqrt.pop %v1372
        %v1417 = vmul.f32 %v1416, %v1372
        %v1418 = vmul.f32 %v1417, %v1416
        %v1419 = vmul.f32 0.5, %v1418
        %v1420 = vsub.f32 1.5, %v1419
        %v1421 = vmul.f32 %v1416, %v1420
        %vm1422 = vweird.f32 %v1372
        %vm1423 = vweird.f32 %v1416
        %vm1424 = vmor %vm1422, %vm1423
        %v1425 = vsel %vm1424, %v1416, %v1421
        %v1426 = vrsqrt.pop %v1373
        %v1427 = vmul.f32 %v1426, %v1373
        %v1428 = vmul.f32 %v1427, %v1426
        %v1429 = vmul.f32 0.5, %v1428
        %v1430 = vsub.f32 1.5, %v1429
        %v1431 = vmul.f32 %v1426, %v1430
        %vm1432 = vweird.f32 %v1373
        %vm1433 = vweird.f32 %v1426
        %vm1434 = vmor %vm1432, %vm1433
        %v1435 = vsel %vm1434, %v1426, %v1431
        %v1436 = vrsqrt.pop %v1374
        %v1437 = vmul.f32 %v1436, %v1374
        %v1438 = vmul.f32 %v1437, %v1436
        %v1439 = vmul.f32 0.5, %v1438
        %v1440 = vsub.f32 1.5, %v1439
        %v1441 = vmul.f32 %v1436, %v1440
        %vm1442 = vweird.f32 %v1374
        %vm1443 = vweird.f32 %v1436
        %vm1444 = vmor %vm1442, %vm1443
        %v1445 = vsel %vm1444, %v1436, %v1441
        %v1446 = vrsqrt.pop %v1375
        %v1447 = vmul.f32 %v1446, %v1375
        %v1448 = vmul.f32 %v1447, %v1446
        %v1449 = vmul.f32 0.5, %v1448
        %v1450 = vsub.f32 1.5, %v1449
        %v1451 = vmul.f32 %v1446, %v1450
        %vm1452 = vweird.f32 %v1375
        %vm1453 = vweird.f32 %v1446
        %vm1454 = vmor %vm1452, %vm1453
        %v1455 = vsel %vm1454, %v1446, %v1451
        %v1456 = vmul.f32 %v1280, %v1280
        %v1457 = vmul.f32 %v1281, %v1281
        %v1458 = vmul.f32 %v1282, %v1282
        %v1459 = vmul.f32 %v1283, %v1283
        %v1460 = vmul.f32 %v1284, %v1284
        %v1461 = vmul.f32 %v1285, %v1285
        %v1462 = vmul.f32 %v1286, %v1286
        %v1463 = vmul.f32 %v1287, %v1287
        %v1464 = vsub.f32 %v1336, %v1456
        %v1465 = vsub.f32 %v1337, %v1457
        %v1466 = vsub.f32 %v1338, %v1458
        %v1467 = vsub.f32 %v1339, %v1459
        %v1468 = vsub.f32 %v1340, %v1460
        %v1469 = vsub.f32 %v1341, %v1461
        %v1470 = vsub.f32 %v1342, %v1462
        %v1471 = vsub.f32 %v1343, %v1463
        %v1472 = vmax.f32 %v1464, 0.0
        %v1473 = vmax.f32 %v1465, 0.0
        %v1474 = vmax.f32 %v1466, 0.0
        %v1475 = vmax.f32 %v1467, 0.0
        %v1476 = vmax.f32 %v1468, 0.0
        %v1477 = vmax.f32 %v1469, 0.0
        %v1478 = vmax.f32 %v1470, 0.0
        %v1479 = vmax.f32 %v1471, 0.0
        %v1480 = vadd.f32 %v1472, 1e-05
        %v1481 = vadd.f32 %v1473, 1e-05
        %v1482 = vadd.f32 %v1474, 1e-05
        %v1483 = vadd.f32 %v1475, 1e-05
        %v1484 = vadd.f32 %v1476, 1e-05
        %v1485 = vadd.f32 %v1477, 1e-05
        %v1486 = vadd.f32 %v1478, 1e-05
        %v1487 = vadd.f32 %v1479, 1e-05
        %v1488 = vrsqrt.pop %v1480
        %v1489 = vmul.f32 %v1488, %v1480
        %v1490 = vmul.f32 %v1489, %v1488
        %v1491 = vmul.f32 0.5, %v1490
        %v1492 = vsub.f32 1.5, %v1491
        %v1493 = vmul.f32 %v1488, %v1492
        %vm1494 = vweird.f32 %v1480
        %vm1495 = vweird.f32 %v1488
        %vm1496 = vmor %vm1494, %vm1495
        %v1497 = vsel %vm1496, %v1488, %v1493
        %v1498 = vrsqrt.pop %v1481
        %v1499 = vmul.f32 %v1498, %v1481
        %v1500 = vmul.f32 %v1499, %v1498
        %v1501 = vmul.f32 0.5, %v1500
        %v1502 = vsub.f32 1.5, %v1501
        %v1503 = vmul.f32 %v1498, %v1502
        %vm1504 = vweird.f32 %v1481
        %vm1505 = vweird.f32 %v1498
        %vm1506 = vmor %vm1504, %vm1505
        %v1507 = vsel %vm1506, %v1498, %v1503
        %v1508 = vrsqrt.pop %v1482
        %v1509 = vmul.f32 %v1508, %v1482
        %v1510 = vmul.f32 %v1509, %v1508
        %v1511 = vmul.f32 0.5, %v1510
        %v1512 = vsub.f32 1.5, %v1511
        %v1513 = vmul.f32 %v1508, %v1512
        %vm1514 = vweird.f32 %v1482
        %vm1515 = vweird.f32 %v1508
        %vm1516 = vmor %vm1514, %vm1515
        %v1517 = vsel %vm1516, %v1508, %v1513
        %v1518 = vrsqrt.pop %v1483
        %v1519 = vmul.f32 %v1518, %v1483
        %v1520 = vmul.f32 %v1519, %v1518
        %v1521 = vmul.f32 0.5, %v1520
        %v1522 = vsub.f32 1.5, %v1521
        %v1523 = vmul.f32 %v1518, %v1522
        %vm1524 = vweird.f32 %v1483
        %vm1525 = vweird.f32 %v1518
        %vm1526 = vmor %vm1524, %vm1525
        %v1527 = vsel %vm1526, %v1518, %v1523
        %v1528 = vrsqrt.pop %v1484
        %v1529 = vmul.f32 %v1528, %v1484
        %v1530 = vmul.f32 %v1529, %v1528
        %v1531 = vmul.f32 0.5, %v1530
        %v1532 = vsub.f32 1.5, %v1531
        %v1533 = vmul.f32 %v1528, %v1532
        %vm1534 = vweird.f32 %v1484
        %vm1535 = vweird.f32 %v1528
        %vm1536 = vmor %vm1534, %vm1535
        %v1537 = vsel %vm1536, %v1528, %v1533
        %v1538 = vrsqrt.pop %v1485
        %v1539 = vmul.f32 %v1538, %v1485
        %v1540 = vmul.f32 %v1539, %v1538
        %v1541 = vmul.f32 0.5, %v1540
        %v1542 = vsub.f32 1.5, %v1541
        %v1543 = vmul.f32 %v1538, %v1542
        %vm1544 = vweird.f32 %v1485
        %vm1545 = vweird.f32 %v1538
        %vm1546 = vmor %vm1544, %vm1545
        %v1547 = vsel %vm1546, %v1538, %v1543
        %v1548 = vrsqrt.pop %v1486
        %v1549 = vmul.f32 %v1548, %v1486
        %v1550 = vmul.f32 %v1549, %v1548
        %v1551 = vmul.f32 0.5, %v1550
        %v1552 = vsub.f32 1.5, %v1551
        %v1553 = vmul.f32 %v1548, %v1552
        %vm1554 = vweird.f32 %v1486
        %vm1555 = vweird.f32 %v1548
        %vm1556 = vmor %vm1554, %vm1555
        %v1557 = vsel %vm1556, %v1548, %v1553
        %v1558 = vrsqrt.pop %v1487
        %v1559 = vmul.f32 %v1558, %v1487
        %v1560 = vmul.f32 %v1559, %v1558
        %v1561 = vmul.f32 0.5, %v1560
        %v1562 = vsub.f32 1.5, %v1561
        %v1563 = vmul.f32 %v1558, %v1562
        %vm1564 = vweird.f32 %v1487
        %vm1565 = vweird.f32 %v1558
        %vm1566 = vmor %vm1564, %vm1565
        %v1567 = vsel %vm1566, %v1558, %v1563
        %v1568 = vsel %vm282, %v1248, %v1280
        %v1569 = vsel %vm282, %v1249, %v1281
        %v1570 = vsel %vm282, %v1250, %v1282
        %v1571 = vsel %vm282, %v1251, %v1283
        %v1572 = vsel %vm282, %v1252, %v1284
        %v1573 = vsel %vm282, %v1253, %v1285
        %v1574 = vsel %vm282, %v1254, %v1286
        %v1575 = vsel %vm282, %v1255, %v1287
        %v1576 = vsel %vm282, %v1385, %v1497
        %v1577 = vsel %vm282, %v1395, %v1507
        %v1578 = vsel %vm282, %v1405, %v1517
        %v1579 = vsel %vm282, %v1415, %v1527
        %v1580 = vsel %vm282, %v1425, %v1537
        %v1581 = vsel %vm282, %v1435, %v1547
        %v1582 = vsel %vm282, %v1445, %v1557
        %v1583 = vsel %vm282, %v1455, %v1567
        %v1584 = vsub.f32 %v1200, %v1568
        %v1585 = vsub.f32 %v1201, %v1569
        %v1586 = vsub.f32 %v1202, %v1570
        %v1587 = vsub.f32 %v1203, %v1571
        %v1588 = vsub.f32 %v1204, %v1572
        %v1589 = vsub.f32 %v1205, %v1573
        %v1590 = vsub.f32 %v1206, %v1574
        %v1591 = vsub.f32 %v1207, %v1575
        %v1592 = vmul.f32 %v1584, %v1576
        %v1593 = vmul.f32 %v1585, %v1577
        %v1594 = vmul.f32 %v1586, %v1578
        %v1595 = vmul.f32 %v1587, %v1579
        %v1596 = vmul.f32 %v1588, %v1580
        %v1597 = vmul.f32 %v1589, %v1581
        %v1598 = vmul.f32 %v1590, %v1582
        %v1599 = vmul.f32 %v1591, %v1583
        %v1600 = vpack.c.bf16 %v1593, %v1592
        %v1601 = vpack.c.bf16 %v1595, %v1594
        %v1602 = vpack.c.bf16 %v1597, %v1596
        %v1603 = vpack.c.bf16 %v1599, %v1598
        %v1604 = vld [vmem:[%s5] sm:$0xf]
        %v1605 = vld [vmem:[%s5 + $0x4] sm:$0xf]
        %v1606 = vld [vmem:[%s5 + $0x8] sm:$0xf]
        %v1607 = vld [vmem:[%s5 + $0xc] sm:$0xf]
        %v1608 = vld [vmem:[%s5 + $0x10] sm:$0xf]
        %v1609 = vld [vmem:[%s5 + $0x14] sm:$0xf]
        %v1610 = vld [vmem:[%s5 + $0x18] sm:$0xf]
        %v1611 = vld [vmem:[%s5 + $0x1c] sm:$0xf]
        %v1612 = vld [vmem:[%s5 + $0x20] sm:$0xf]
        %v1613 = vld [vmem:[%s5 + $0x24] sm:$0xf]
        %v1614 = vld [vmem:[%s5 + $0x28] sm:$0xf]
        %v1615 = vld [vmem:[%s5 + $0x2c] sm:$0xf]
        %v1616 = vld [vmem:[%s5 + $0x30] sm:$0xf]
        %v1617 = vld [vmem:[%s5 + $0x34] sm:$0xf]
        %v1618 = vld [vmem:[%s5 + $0x38] sm:$0xf]
        %v1619 = vld [vmem:[%s5 + $0x3c] sm:$0xf]
        %v1620 = vld [vmem:[%s6] sm:$0x1]
        %v1622 = vperm.slane %v1620, 0
        %v1640 = vunpack.c.l.b16 %v1604
        %v1641 = vunpack.c.l.b16 %v1605
        %v1642 = vunpack.c.l.b16 %v1606
        %v1643 = vunpack.c.l.b16 %v1607
        %v1644 = vunpack.c.l.b16 %v1608
        %v1645 = vunpack.c.l.b16 %v1609
        %v1646 = vunpack.c.l.b16 %v1610
        %v1647 = vunpack.c.l.b16 %v1611
        %v1648 = vunpack.c.l.b16 %v1612
        %v1649 = vunpack.c.l.b16 %v1613
        %v1650 = vunpack.c.l.b16 %v1614
        %v1651 = vunpack.c.l.b16 %v1615
        %v1652 = vunpack.c.l.b16 %v1616
        %v1653 = vunpack.c.l.b16 %v1617
        %v1654 = vunpack.c.l.b16 %v1618
        %v1655 = vunpack.c.l.b16 %v1619
        %v1656 = vpack.c.b16 %v1641, %v1640
        %v1657 = vpack.c.b16 %v1643, %v1642
        %v1658 = vpack.c.b16 %v1645, %v1644
        %v1659 = vpack.c.b16 %v1647, %v1646
        %v1660 = vpack.c.b16 %v1649, %v1648
        %v1661 = vpack.c.b16 %v1651, %v1650
        %v1662 = vpack.c.b16 %v1653, %v1652
        %v1663 = vpack.c.b16 %v1655, %v1654
        %1672 = vmatpush.bf16.msra.mxu0 %v1663
        %1673 = vmatpush.bf16.msra.mxu0 %v1662
        %1674 = vmatpush.bf16.msra.mxu0 %v1661
        %1675 = vmatpush.bf16.msra.mxu0 %v1660
        %1676 = vmatpush.bf16.msra.mxu0 %v1659
        %1677 = vmatpush.bf16.msra.mxu0 %v1658
        %1678 = vmatpush.bf16.msra.mxu0 %v1657
        %1679 = vmatpush.bf16.msra.mxu0 %v1656
        %1680 = vmatmul.bf16.gmra.mxu0 %v1600
        %v1681 = vpop.f32.mrf.mxu0
        %v1682 = vadd.f32 %v1622, %v1681
        %v1683 = vpop.f32.mrf.mxu0
        %v1684 = vadd.f32 %v1622, %v1683
        %1685 = vmatmul.bf16.gmra.mxu0 %v1601
        %v1686 = vpop.f32.mrf.mxu0
        %v1687 = vadd.f32 %v1622, %v1686
        %v1688 = vpop.f32.mrf.mxu0
        %v1689 = vadd.f32 %v1622, %v1688
        %1690 = vmatmul.bf16.gmra.mxu0 %v1602
        %v1691 = vpop.f32.mrf.mxu0
        %v1692 = vadd.f32 %v1622, %v1691
        %v1693 = vpop.f32.mrf.mxu0
        %v1694 = vadd.f32 %v1622, %v1693
        %1695 = vmatmul.bf16.gmra.mxu0 %v1603
        %v1696 = vpop.f32.mrf.mxu0
        %v1697 = vadd.f32 %v1622, %v1696
        %v1698 = vpop.f32.mrf.mxu0
        %v1699 = vadd.f32 %v1622, %v1698
        %1700 = vdwg.mxu0
        %1701 = vst [vmem:[%s272] sm:$0xff] %v1682
        %1702 = vst [vmem:[%s272 + $0x8] sm:$0xff] %v1684
        %1703 = vst [vmem:[%s272 + $0x10] sm:$0xff] %v1687
        %1704 = vst [vmem:[%s272 + $0x18] sm:$0xff] %v1689
        %1705 = vst [vmem:[%s272 + $0x20] sm:$0xff] %v1692
        %1706 = vst [vmem:[%s272 + $0x28] sm:$0xff] %v1694
        %1707 = vst [vmem:[%s272 + $0x30] sm:$0xff] %v1697
        %1708 = vst [vmem:[%s272 + $0x38] sm:$0xff] %v1699
        %s1709 = sand.u32 %s181, 1
        %s1710 = scalar_lea.sflag [#allocation3], %s1709
        %s1711 = sand.u32 %s181, 1
        %s1712 = smul.addr %s1711, 64
        %s1713 = scalar_lea.vmem [#allocation2], %s1712
        // Predicated region
        $region49: #{tpu_custom_call.1} parent=47 // pred_check
          %p1714 = pneg %p191
        $region50: #{tpu_custom_call.1} parent=47 // pred_check_branch
          %1716 = sbr.rel (%p1714) target = $region52
        $region51: #{tpu_custom_call.1} parent=47 // pred_region
          %s1717 = smul.u32 8, %s21
          %1719 = vsyncadd %s1710, 0
          %s1720 = smul.addr %s1717, 8
          %s1721 = scalar_lea.hbm %s7, %s1720
          %s1722 = sshll.u32 %s1713, 4
          %s1723 = int_to_ptr.vmem [resolvable:$true] %s1722
          %s1724 = sshll.u32 %s1721, 4
          %s1725 = int_to_ptr.hbm [resolvable:$true] %s1724
          %1730 = dma.vmem_to_hbm [thread:$0]  %s1723, 1024, %s1725, %s1710, 128, 128, 8
        $region52: #{tpu_custom_call.1} parent=47 // pred_fallthru
          _
      $region48: #{tpu_custom_call.1} parent=5 // pred_fallthru
        _
      %p1731 = scmp.le.s32.totalorder 2, %s16
      // Predicated region
      $region53: #{tpu_custom_call.1} parent=5 // pred_check
        %p1732 = pneg %p1731
      $region54: #{tpu_custom_call.1} parent=5 // pred_check_branch
        %1734 = sbr.rel (%p1732) target = $region56
      $region55: #{tpu_custom_call.1} parent=5 // pred_region
        %s1735 = ssub.s32 %s16, 2
        // Predicated region
        $region57: #{tpu_custom_call.1} parent=55 // pred_check
          %p1736 = pneg %p197
        $region58: #{tpu_custom_call.1} parent=55 // pred_check_branch
          %1738 = sbr.rel (%p1736) target = $region60
        $region59: #{tpu_custom_call.1} parent=55 // pred_region
          %s1739 = sand.u32 %s182, 1
          %s1740 = scalar_lea.sflag [#allocation3], %s1739
          %s1741 = sand.u32 %s182, 1
          %s1742 = smul.addr %s1741, 64
          %s1743 = scalar_lea.vmem [#allocation2], %s1742
          %1745 = dma.done %s1740, 1024
        $region60: #{tpu_custom_call.1} parent=55 // pred_fallthru
          _
      $region56: #{tpu_custom_call.1} parent=5 // pred_fallthru
        _
    $region6: #{tpu_custom_call.1} parent=1 // loop_footer
      %s20 = sadd.s32 1, %s16
    $region7: #{tpu_custom_call.1} parent=1 // loop_footer_branch
      %15 = sbr.rel target = $region3
    $region8: #{tpu_custom_call.1} parent=1 // loop_exit
      _
    %1746 = vsyncpa [#allocation3], 1
    %s1747 = scalar_lea.sflag [#allocation3], 1
    %1748 = vsyncpa %s1747, 1

</llo_original>
